<compile_context>
chip_gen: v7x
topology: tpu7x:2x2x1
jax: 0.10.0
libtpu: 0.0.40
codegen_flags: <defaults>
</compile_context>

<pallas_src>
import math
import jax
import jax.numpy as jnp
from jax import lax
from jax.experimental import pallas as pl
from jax.experimental.pallas import tpu as pltpu

# ---- synthetic "args" ----
D_MODEL = 32
N_HEADS = 4
D_QK = 8            # d_queries (= d_keys)
D_V = 8             # d_values
D_INNER = 64
LN_EPS = 1e-5
NEG_INF = -1e30

HQK = N_HEADS * D_QK          # 32
HV = N_HEADS * D_V            # 32
QKV_OUT = 2 * HQK + HV        # 96   (q | k | v concatenated on the output axis)
QKV_PAD = 128                 # qkv output padded to one full 128-lane vreg row

# column offsets inside the fused bf16 weight slab (all 128-lane aligned)
WO_COL = 128
W1_COL = 256
WA_COLS = 384
VEC_ROWS, VEC_COLS = 8, 128   # packed LN/bias slab = exactly one f32 vreg


# ---------------- fused encoder-layer kernel ----------------
def _layer_norm(x, g, b):
    mu = jnp.mean(x, axis=-1, keepdims=True)
    var = jnp.mean((x - mu) ** 2, axis=-1, keepdims=True)
    return (x - mu) * lax.rsqrt(var + LN_EPS) * g + b


def _encoder_layer_kernel(lens_ref,        # (B_pad,) int32, SMEM scalar-prefetch
                          x_ref,           # (BB, T, D) f32
                          vec_ref,         # (8, 128)  f32 packed LN/bias slab
                          wa_ref,          # (D, 384)  bf16 packed [wqkv(pad128) | wo | pad | w1 | pad]
                          w2_ref,          # (D_INNER, D) bf16
                          o_ref):          # (BB, T, D) f32
    b0 = pl.program_id(0)
    BB, T, D = x_ref.shape
    N = BB * T

    # --- unpack the parameter slabs (static slices; vec slab is a single vreg) ---
    ln1g, ln1b = vec_ref[0:1, :D], vec_ref[1:2, :D]
    bqkv = vec_ref[2:3, :]                       # (1,128): [bq*s | bk | bv | 0]  (scale folded)
    bo = vec_ref[3:4, :D]
    ln2g, ln2b = vec_ref[4:5, :D], vec_ref[5:6, :D]
    b1 = vec_ref[6:7, :D_INNER]
    b2 = vec_ref[7:8, :D]

    x = x_ref[...].reshape(N, D)                 # layout-trivial leading collapse (T = sublane tile)

    # --- self-attention sublayer (pre-LN), fused bf16 QKV projection on the MXU ---
    xn = _layer_norm(x, ln1g, ln1b)                                       # f32 (VPU/EUP)
    qkv = jnp.dot(xn.astype(jnp.bfloat16), wa_ref[:, 0:QKV_PAD],
                  preferred_element_type=jnp.float32) + bqkv              # (N, 128) lane-dense
    qkv3 = qkv.reshape(BB, T, QKV_PAD)

    # per-sequence additive key-padding mask from prefetched lengths (SMEM scalar reads)
    key_idx = lax.broadcasted_iota(jnp.int32, (BB, T, T), 2)
    b_idx = lax.broadcasted_iota(jnp.int32, (BB, T, T), 0)
    mask = jnp.zeros((BB, T, T), jnp.float32)
    for i in range(BB):                          # static unroll over the BB sequences in this block
        mask = jnp.where((b_idx == i) & (key_idx >= lens_ref[b0 * BB + i]), NEG_INF, mask)

    heads = []
    for h in range(N_HEADS):                     # static unroll; einsums batched over BB sequences
        q_h = qkv3[:, :, h * D_QK:(h + 1) * D_QK].astype(jnp.bfloat16)
        k_h = qkv3[:, :, HQK + h * D_QK:HQK + (h + 1) * D_QK].astype(jnp.bfloat16)
        v_h = qkv3[:, :, 2 * HQK + h * D_V:2 * HQK + (h + 1) * D_V].astype(jnp.bfloat16)
        # 1/sqrt(d_qk) already folded into wq/bq at pack time -> no per-step scale multiply
        s = jnp.einsum('bqd,bkd->bqk', q_h, k_h,
                       preferred_element_type=jnp.float32) + mask
        s = s - jnp.max(s, axis=-1, keepdims=True)                        # f32 softmax
        p = jnp.exp(s)
        p = p * pl.reciprocal(jnp.sum(p, axis=-1, keepdims=True), approx=True)
        heads.append(jnp.einsum('bqk,bkd->bqd', p.astype(jnp.bfloat16), v_h,
                                preferred_element_type=jnp.float32))
    att = jnp.concatenate(heads, axis=-1).reshape(N, HV)                  # (N, 32)
    att = jnp.dot(att.astype(jnp.bfloat16), wa_ref[:, WO_COL:WO_COL + D],
                  preferred_element_type=jnp.float32) + bo                # output projection
    x1 = x + att                                                          # residual 1 (f32)

    # --- position-wise FFN sublayer (pre-LN), bf16 MXU / f32 VPU ---
    xn2 = _layer_norm(x1, ln2g, ln2b)
    hdn = jnp.dot(xn2.astype(jnp.bfloat16), wa_ref[:, W1_COL:W1_COL + D_INNER],
                  preferred_element_type=jnp.float32) + b1
    hdn = jnp.maximum(hdn, 0.0)                                           # ReLU
    ffn = jnp.dot(hdn.astype(jnp.bfloat16), w2_ref[...],
                  preferred_element_type=jnp.float32) + b2
    o_ref[...] = (x1 + ffn).reshape(BB, T, D)                             # residual 2


# ---------------- one-time (weight-time) parameter packing ----------------
def pack_params(params):
    """Fold 1/sqrt(d_qk) into wq/bq, pack wqkv|wo|w1 into one 128-lane-aligned bf16 slab,
    and pack every LN gamma/beta + bias into one (8,128) f32 vreg slab."""
    p_att, p_fcn = params["self_attn"], params["fcn"]
    scale = 1.0 / math.sqrt(D_QK)

    wa = jnp.zeros((D_MODEL, WA_COLS), jnp.float32)
    wa = wa.at[:, 0:HQK].set(p_att["wq"] * scale)
    wa = wa.at[:, HQK:2 * HQK].set(p_att["wk"])
    wa = wa.at[:, 2 * HQK:QKV_OUT].set(p_att["wv"])
    wa = wa.at[:, WO_COL:WO_COL + D_MODEL].set(p_att["wo"])
    wa = wa.at[:, W1_COL:W1_COL + D_INNER].set(p_fcn["w1"])
    wa = wa.astype(jnp.bfloat16)

    w2 = p_fcn["w2"].astype(jnp.bfloat16)

    vec = jnp.zeros((VEC_ROWS, VEC_COLS), jnp.float32)
    vec = vec.at[0, :D_MODEL].set(p_att["ln_g"])
    vec = vec.at[1, :D_MODEL].set(p_att["ln_b"])
    vec = vec.at[2, 0:HQK].set(p_att["bq"] * scale)
    vec = vec.at[2, HQK:2 * HQK].set(p_att["bk"])
    vec = vec.at[2, 2 * HQK:QKV_OUT].set(p_att["bv"])
    vec = vec.at[3, :D_MODEL].set(p_att["bo"])
    vec = vec.at[4, :D_MODEL].set(p_fcn["ln_g"])
    vec = vec.at[5, :D_MODEL].set(p_fcn["ln_b"])
    vec = vec.at[6, :D_INNER].set(p_fcn["b1"])
    vec = vec.at[7, :D_MODEL].set(p_fcn["b2"])
    return vec, wa, w2


# ---------------- wrapper ----------------
def encoder_layer_forward(packed_params, encoder_sequences, encoder_sequence_lengths):
    """Fused EncoderLayer forward: one pallas_call, BB sequences per grid step."""
    vec, wa, w2 = packed_params
    B, T, D = encoder_sequences.shape

    BB = B if B <= 8 else 8                      # sequences per grid step (amortize per-step cost)
    grid_b = pl.cdiv(B, BB)
    B_pad = grid_b * BB
    x = encoder_sequences
    lens = encoder_sequence_lengths.astype(jnp.int32)
    if B_pad != B:
        x = jnp.pad(x, ((0, B_pad - B), (0, 0), (0, 0)))
        lens = jnp.pad(lens, (0, B_pad - B))     # padded rows: len 0 -> harmless, sliced off below

    out = pl.pallas_call(
        _encoder_layer_kernel,
        out_shape=jax.ShapeDtypeStruct((B_pad, T, D), jnp.float32),
        grid_spec=pltpu.PrefetchScalarGridSpec(
            num_scalar_prefetch=1,
            grid=(grid_b,),
            in_specs=[
                pl.BlockSpec((BB, T, D), lambda b, lens: (b, 0, 0)),          # x
                pl.BlockSpec((VEC_ROWS, VEC_COLS), lambda b, lens: (0, 0)),   # LN/bias slab
                pl.BlockSpec((D_MODEL, WA_COLS), lambda b, lens: (0, 0)),     # wqkv|wo|w1 slab
                pl.BlockSpec((D_INNER, D_MODEL), lambda b, lens: (0, 0)),     # w2
            ],
            out_specs=pl.BlockSpec((BB, T, D), lambda b, lens: (b, 0, 0)),
        ),
        compiler_params=pltpu.CompilerParams(
            # grid==1 for small batches (no cross-TC split to amortize); batch axis independent otherwise
            dimension_semantics=("arbitrary",) if grid_b == 1 else ("parallel",)),
    )(lens, x, vec, wa, w2)

    if B_pad != B:
        out = out[:B]
    gating_variances = None   # non-MoE PositionWiseFCNetwork
    return out, gating_variances


# ---------------- parameter init (deterministic, synthetic) ----------------
def init_params(key):
    keys = iter(jax.random.split(key, 64))

    def dense(din, dout):
        w = 0.02 * jax.random.normal(next(keys), (din, dout), jnp.float32)
        b = jnp.zeros((dout,), jnp.float32)
        return w, b

    att = {"ln_g": jnp.ones((D_MODEL,), jnp.float32),
           "ln_b": jnp.zeros((D_MODEL,), jnp.float32)}
    att["wq"], att["bq"] = dense(D_MODEL, HQK)
    att["wk"], att["bk"] = dense(D_MODEL, HQK)
    att["wv"], att["bv"] = dense(D_MODEL, HV)
    att["wo"], att["bo"] = dense(HV, D_MODEL)

    fcn = {"ln_g": jnp.ones((D_MODEL,), jnp.float32),
           "ln_b": jnp.zeros((D_MODEL,), jnp.float32)}
    fcn["w1"], fcn["b1"] = dense(D_MODEL, D_INNER)
    fcn["w2"], fcn["b2"] = dense(D_INNER, D_MODEL)

    return {"self_attn": att, "fcn": fcn}


# ---------------- pure-JAX reference (for correctness check) ----------------
def reference_forward(params, x, lens):
    B, T, D = x.shape
    p = params["self_attn"]
    f = params["fcn"]

    def ln(t, g, b):
        mu = jnp.mean(t, axis=-1, keepdims=True)
        var = jnp.mean((t - mu) ** 2, axis=-1, keepdims=True)
        return (t - mu) * lax.rsqrt(var + LN_EPS) * g + b

    xn = ln(x, p["ln_g"], p["ln_b"])
    q = (xn @ p["wq"] + p["bq"]).reshape(B, T, N_HEADS, D_QK).transpose(0, 2, 1, 3)
    k = (xn @ p["wk"] + p["bk"]).reshape(B, T, N_HEADS, D_QK).transpose(0, 2, 1, 3)
    v = (xn @ p["wv"] + p["bv"]).reshape(B, T, N_HEADS, D_V).transpose(0, 2, 1, 3)
    s = jnp.einsum('bhqd,bhkd->bhqk', q, k) / math.sqrt(D_QK)
    key_ok = jnp.arange(T)[None, None, None, :] < lens[:, None, None, None]
    s = jnp.where(key_ok, s, NEG_INF)
    pmat = jax.nn.softmax(s, axis=-1)
    o = jnp.einsum('bhqk,bhkd->bhqd', pmat, v).transpose(0, 2, 1, 3).reshape(B, T, HV)
    x1 = x + (o @ p["wo"] + p["bo"])
    xn2 = ln(x1, f["ln_g"], f["ln_b"])
    h = jnp.maximum(xn2 @ f["w1"] + f["b1"], 0.0)
    return x1 + (h @ f["w2"] + f["b2"])


if __name__ == "__main__":
    key = jax.random.PRNGKey(0)
    k_par, k_seq = jax.random.split(key, 2)

    B, T_ENC = 2, 8
    params = init_params(k_par)
    packed = pack_params(params)      # one-time weight packing (scale fold, bf16 cast, slab concat)

    encoder_sequences = jax.random.normal(k_seq, (B, T_ENC, D_MODEL), jnp.float32)
    encoder_sequence_lengths = jnp.array([T_ENC, 5], dtype=jnp.int32)

    out, gating_variances = encoder_layer_forward(
        packed, encoder_sequences, encoder_sequence_lengths)
    out = jax.block_until_ready(out)

    assert out.shape == (B, T_ENC, D_MODEL)
    assert bool(jnp.all(jnp.isfinite(out)))
    assert gating_variances is None

    ref = reference_forward(params, encoder_sequences, encoder_sequence_lengths)
    assert bool(jnp.allclose(out, ref, atol=5e-3, rtol=5e-3)), \
        f"max abs err {float(jnp.max(jnp.abs(out - ref)))}"

    print("KERNEL_OK")
</pallas_src>

<mosaic_0001>
module attributes {stable_mosaic.version = 11 : i64} {
  func.func @_encoder_layer_kernel(%arg0: i32, %arg1: memref<2xi32, #tpu.memory_space<smem>>, %arg2: memref<2x8x32xf32, #tpu.memory_space<vmem>>, %arg3: memref<8x128xf32, #tpu.memory_space<vmem>>, %arg4: memref<32x384xbf16, #tpu.memory_space<vmem>>, %arg5: memref<64x32xbf16, #tpu.memory_space<vmem>>, %arg6: memref<2x8x32xf32, #tpu.memory_space<vmem>>) attributes {dimension_semantics = [#tpu.dimension_semantics<arbitrary>], iteration_bounds = array<i64: 1>, scalar_prefetch = 1 : i64, scratch_operands = 0 : i64, tpu.core_type = #tpu.core_type<tc>, window_params = [{transform_indices = @transform_0, window_bounds = array<i64: 2, 8, 32>}, {pipeline_mode = #tpu.pipeline_mode<synchronous>, transform_indices = @transform_1, window_bounds = array<i64: 8, 128>}, {pipeline_mode = #tpu.pipeline_mode<synchronous>, transform_indices = @transform_2, window_bounds = array<i64: 32, 384>}, {pipeline_mode = #tpu.pipeline_mode<synchronous>, transform_indices = @transform_3, window_bounds = array<i64: 64, 32>}, {transform_indices = @transform_4, window_bounds = array<i64: 2, 8, 32>}]} {
    %c0 = arith.constant 0 : index
    %c0_0 = arith.constant 0 : index
    %0 = vector.load %arg3[%c0, %c0_0] : memref<8x128xf32, #tpu.memory_space<vmem>>, vector<1x32xf32>
    %c1 = arith.constant 1 : index
    %c0_1 = arith.constant 0 : index
    %1 = vector.load %arg3[%c1, %c0_1] : memref<8x128xf32, #tpu.memory_space<vmem>>, vector<1x32xf32>
    %c2 = arith.constant 2 : index
    %c0_2 = arith.constant 0 : index
    %2 = vector.load %arg3[%c2, %c0_2] : memref<8x128xf32, #tpu.memory_space<vmem>>, vector<1x128xf32>
    %c3 = arith.constant 3 : index
    %c0_3 = arith.constant 0 : index
    %3 = vector.load %arg3[%c3, %c0_3] : memref<8x128xf32, #tpu.memory_space<vmem>>, vector<1x32xf32>
    %c4 = arith.constant 4 : index
    %c0_4 = arith.constant 0 : index
    %4 = vector.load %arg3[%c4, %c0_4] : memref<8x128xf32, #tpu.memory_space<vmem>>, vector<1x32xf32>
    %c5 = arith.constant 5 : index
    %c0_5 = arith.constant 0 : index
    %5 = vector.load %arg3[%c5, %c0_5] : memref<8x128xf32, #tpu.memory_space<vmem>>, vector<1x32xf32>
    %c6 = arith.constant 6 : index
    %c0_6 = arith.constant 0 : index
    %6 = vector.load %arg3[%c6, %c0_6] : memref<8x128xf32, #tpu.memory_space<vmem>>, vector<1x64xf32>
    %c7 = arith.constant 7 : index
    %c0_7 = arith.constant 0 : index
    %7 = vector.load %arg3[%c7, %c0_7] : memref<8x128xf32, #tpu.memory_space<vmem>>, vector<1x32xf32>
    %c0_8 = arith.constant 0 : index
    %c0_9 = arith.constant 0 : index
    %c0_10 = arith.constant 0 : index
    %8 = vector.load %arg2[%c0_8, %c0_9, %c0_10] : memref<2x8x32xf32, #tpu.memory_space<vmem>>, vector<2x8x32xf32>
    %9 = vector.shape_cast %8 : vector<2x8x32xf32> to vector<16x32xf32>
    %cst = arith.constant dense<0.000000e+00> : vector<16xf32>
    %10 = vector.multi_reduction <add>, %9, %cst [1] : vector<16x32xf32> to vector<16xf32>
    %11 = vector.shape_cast %10 : vector<16xf32> to vector<16x1xf32>
    %cst_11 = arith.constant 3.200000e+01 : f32
    %12 = vector.broadcast %cst_11 : f32 to vector<16x1xf32>
    %13 = arith.divf %11, %12 : vector<16x1xf32>
    %14 = vector.broadcast %13 : vector<16x1xf32> to vector<16x32xf32>
    %15 = arith.subf %9, %14 : vector<16x32xf32>
    %16 = arith.mulf %15, %15 : vector<16x32xf32>
    %cst_12 = arith.constant dense<0.000000e+00> : vector<16xf32>
    %17 = vector.multi_reduction <add>, %16, %cst_12 [1] : vector<16x32xf32> to vector<16xf32>
    %18 = vector.shape_cast %17 : vector<16xf32> to vector<16x1xf32>
    %cst_13 = arith.constant 3.200000e+01 : f32
    %19 = vector.broadcast %cst_13 : f32 to vector<16x1xf32>
    %20 = arith.divf %18, %19 : vector<16x1xf32>
    %21 = vector.broadcast %13 : vector<16x1xf32> to vector<16x32xf32>
    %22 = arith.subf %9, %21 : vector<16x32xf32>
    %cst_14 = arith.constant 9.99999974E-6 : f32
    %23 = vector.broadcast %cst_14 : f32 to vector<16x1xf32>
    %24 = arith.addf %20, %23 : vector<16x1xf32>
    %25 = math.rsqrt %24 : vector<16x1xf32>
    %26 = vector.broadcast %25 : vector<16x1xf32> to vector<16x32xf32>
    %27 = arith.mulf %22, %26 : vector<16x32xf32>
    %28 = vector.broadcast %0 : vector<1x32xf32> to vector<16x32xf32>
    %29 = arith.mulf %27, %28 : vector<16x32xf32>
    %30 = vector.broadcast %1 : vector<1x32xf32> to vector<16x32xf32>
    %31 = arith.addf %29, %30 : vector<16x32xf32>
    %32 = arith.truncf %31 : vector<16x32xf32> to vector<16x32xbf16>
    %c0_15 = arith.constant 0 : index
    %c0_16 = arith.constant 0 : index
    %33 = vector.load %arg4[%c0_15, %c0_16] : memref<32x384xbf16, #tpu.memory_space<vmem>>, vector<32x128xbf16>
    %cst_17 = arith.constant dense<0.000000e+00> : vector<16x128xf32>
    %34 = tpu.matmul %32, %33, %cst_17 {dimension_numbers = #tpu.dot_dimension_numbers<[1], [0], [0], [1], [0, 0, 1, 1], [], []>} : vector<16x32xbf16>, vector<32x128xbf16>, vector<16x128xf32> -> vector<16x128xf32>
    %35 = vector.broadcast %2 : vector<1x128xf32> to vector<16x128xf32>
    %36 = arith.addf %34, %35 : vector<16x128xf32>
    %37 = vector.shape_cast %36 : vector<16x128xf32> to vector<2x8x128xf32>
    %38 = tpu.iota {dimensions = array<i32: 2>} : vector<2x8x8xi32>
    %39 = tpu.iota {dimensions = array<i32: 0>} : vector<2x8x8xi32>
    %cst_18 = arith.constant 0.000000e+00 : f32
    %40 = vector.broadcast %cst_18 : f32 to vector<2x8x8xf32>
    %c0_i32 = arith.constant 0 : i32
    %41 = vector.broadcast %c0_i32 : i32 to vector<2x8x8xi32>
    %42 = arith.cmpi eq, %39, %41 : vector<2x8x8xi32>
    %c2_i32 = arith.constant 2 : i32
    %43 = arith.muli %arg0, %c2_i32 : i32
    %c0_i32_19 = arith.constant 0 : i32
    %44 = arith.addi %43, %c0_i32_19 : i32
    %45 = arith.index_cast %44 : i32 to index
    %46 = memref.load %arg1[%45] : memref<2xi32, #tpu.memory_space<smem>>
    %47 = vector.broadcast %46 : i32 to vector<2x8x8xi32>
    %48 = arith.cmpi sge, %38, %47 : vector<2x8x8xi32>
    %49 = arith.andi %42, %48 : vector<2x8x8xi1>
    %cst_20 = arith.constant -1.000000e+30 : f32
    %50 = vector.broadcast %cst_20 : f32 to vector<2x8x8xf32>
    %51 = arith.select %49, %50, %40 : vector<2x8x8xi1>, vector<2x8x8xf32>
    %c1_i32 = arith.constant 1 : i32
    %52 = vector.broadcast %c1_i32 : i32 to vector<2x8x8xi32>
    %53 = arith.cmpi eq, %39, %52 : vector<2x8x8xi32>
    %c2_i32_21 = arith.constant 2 : i32
    %54 = arith.muli %arg0, %c2_i32_21 : i32
    %c1_i32_22 = arith.constant 1 : i32
    %55 = arith.addi %54, %c1_i32_22 : i32
    %56 = arith.index_cast %55 : i32 to index
    %57 = memref.load %arg1[%56] : memref<2xi32, #tpu.memory_space<smem>>
    %58 = vector.broadcast %57 : i32 to vector<2x8x8xi32>
    %59 = arith.cmpi sge, %38, %58 : vector<2x8x8xi32>
    %60 = arith.andi %53, %59 : vector<2x8x8xi1>
    %cst_23 = arith.constant -1.000000e+30 : f32
    %61 = vector.broadcast %cst_23 : f32 to vector<2x8x8xf32>
    %62 = arith.select %60, %61, %51 : vector<2x8x8xi1>, vector<2x8x8xf32>
    %63 = vector.extract_strided_slice %37 {offsets = [0, 0, 0], sizes = [2, 8, 8], strides = [1, 1, 1]} : vector<2x8x128xf32> to vector<2x8x8xf32>
    %64 = arith.truncf %63 : vector<2x8x8xf32> to vector<2x8x8xbf16>
    %65 = vector.extract_strided_slice %37 {offsets = [0, 0, 32], sizes = [2, 8, 8], strides = [1, 1, 1]} : vector<2x8x128xf32> to vector<2x8x8xf32>
    %66 = arith.truncf %65 : vector<2x8x8xf32> to vector<2x8x8xbf16>
    %67 = vector.extract_strided_slice %37 {offsets = [0, 0, 64], sizes = [2, 8, 8], strides = [1, 1, 1]} : vector<2x8x128xf32> to vector<2x8x8xf32>
    %68 = arith.truncf %67 : vector<2x8x8xf32> to vector<2x8x8xbf16>
    "tpu.trace_start"() <{level = 10 : i32, message = "bqd,bkd->bqk"}> : () -> ()
    %cst_24 = arith.constant dense<0.000000e+00> : vector<2x8x8xf32>
    %69 = tpu.matmul %64, %66, %cst_24 {dimension_numbers = #tpu.dot_dimension_numbers<[2], [2], [1], [1], [0, 0, 0, 1, 1, 1], [0], [0]>} : vector<2x8x8xbf16>, vector<2x8x8xbf16>, vector<2x8x8xf32> -> vector<2x8x8xf32>
    "tpu.trace_stop"() : () -> ()
    %70 = arith.addf %69, %62 : vector<2x8x8xf32>
    %cst_25 = arith.constant dense<0xFF800000> : vector<2x8xf32>
    %71 = vector.multi_reduction <maximumf>, %70, %cst_25 [2] : vector<2x8x8xf32> to vector<2x8xf32>
    %72 = vector.shape_cast %71 : vector<2x8xf32> to vector<2x8x1xf32>
    %73 = vector.broadcast %72 : vector<2x8x1xf32> to vector<2x8x8xf32>
    %74 = arith.subf %70, %73 : vector<2x8x8xf32>
    %75 = math.exp %74 : vector<2x8x8xf32>
    %cst_26 = arith.constant dense<0.000000e+00> : vector<2x8xf32>
    %76 = vector.multi_reduction <add>, %75, %cst_26 [2] : vector<2x8x8xf32> to vector<2x8xf32>
    %77 = vector.shape_cast %76 : vector<2x8xf32> to vector<2x8x1xf32>
    %78 = tpu.reciprocal %77 {approx = true} : vector<2x8x1xf32> -> vector<2x8x1xf32>
    %79 = vector.broadcast %78 : vector<2x8x1xf32> to vector<2x8x8xf32>
    %80 = arith.mulf %75, %79 : vector<2x8x8xf32>
    %81 = arith.truncf %80 : vector<2x8x8xf32> to vector<2x8x8xbf16>
    "tpu.trace_start"() <{level = 10 : i32, message = "bqk,bkd->bqd"}> : () -> ()
    %cst_27 = arith.constant dense<0.000000e+00> : vector<2x8x8xf32>
    %82 = tpu.matmul %81, %68, %cst_27 {dimension_numbers = #tpu.dot_dimension_numbers<[2], [1], [1], [2], [0, 0, 0, 1, 1, 2], [0], [0]>} : vector<2x8x8xbf16>, vector<2x8x8xbf16>, vector<2x8x8xf32> -> vector<2x8x8xf32>
    "tpu.trace_stop"() : () -> ()
    %83 = vector.extract_strided_slice %37 {offsets = [0, 0, 8], sizes = [2, 8, 8], strides = [1, 1, 1]} : vector<2x8x128xf32> to vector<2x8x8xf32>
    %84 = arith.truncf %83 : vector<2x8x8xf32> to vector<2x8x8xbf16>
    %85 = vector.extract_strided_slice %37 {offsets = [0, 0, 40], sizes = [2, 8, 8], strides = [1, 1, 1]} : vector<2x8x128xf32> to vector<2x8x8xf32>
    %86 = arith.truncf %85 : vector<2x8x8xf32> to vector<2x8x8xbf16>
    %87 = vector.extract_strided_slice %37 {offsets = [0, 0, 72], sizes = [2, 8, 8], strides = [1, 1, 1]} : vector<2x8x128xf32> to vector<2x8x8xf32>
    %88 = arith.truncf %87 : vector<2x8x8xf32> to vector<2x8x8xbf16>
    "tpu.trace_start"() <{level = 10 : i32, message = "bqd,bkd->bqk"}> : () -> ()
    %cst_28 = arith.constant dense<0.000000e+00> : vector<2x8x8xf32>
    %89 = tpu.matmul %84, %86, %cst_28 {dimension_numbers = #tpu.dot_dimension_numbers<[2], [2], [1], [1], [0, 0, 0, 1, 1, 1], [0], [0]>} : vector<2x8x8xbf16>, vector<2x8x8xbf16>, vector<2x8x8xf32> -> vector<2x8x8xf32>
    "tpu.trace_stop"() : () -> ()
    %90 = arith.addf %89, %62 : vector<2x8x8xf32>
    %cst_29 = arith.constant dense<0xFF800000> : vector<2x8xf32>
    %91 = vector.multi_reduction <maximumf>, %90, %cst_29 [2] : vector<2x8x8xf32> to vector<2x8xf32>
    %92 = vector.shape_cast %91 : vector<2x8xf32> to vector<2x8x1xf32>
    %93 = vector.broadcast %92 : vector<2x8x1xf32> to vector<2x8x8xf32>
    %94 = arith.subf %90, %93 : vector<2x8x8xf32>
    %95 = math.exp %94 : vector<2x8x8xf32>
    %cst_30 = arith.constant dense<0.000000e+00> : vector<2x8xf32>
    %96 = vector.multi_reduction <add>, %95, %cst_30 [2] : vector<2x8x8xf32> to vector<2x8xf32>
    %97 = vector.shape_cast %96 : vector<2x8xf32> to vector<2x8x1xf32>
    %98 = tpu.reciprocal %97 {approx = true} : vector<2x8x1xf32> -> vector<2x8x1xf32>
    %99 = vector.broadcast %98 : vector<2x8x1xf32> to vector<2x8x8xf32>
    %100 = arith.mulf %95, %99 : vector<2x8x8xf32>
    %101 = arith.truncf %100 : vector<2x8x8xf32> to vector<2x8x8xbf16>
    "tpu.trace_start"() <{level = 10 : i32, message = "bqk,bkd->bqd"}> : () -> ()
    %cst_31 = arith.constant dense<0.000000e+00> : vector<2x8x8xf32>
    %102 = tpu.matmul %101, %88, %cst_31 {dimension_numbers = #tpu.dot_dimension_numbers<[2], [1], [1], [2], [0, 0, 0, 1, 1, 2], [0], [0]>} : vector<2x8x8xbf16>, vector<2x8x8xbf16>, vector<2x8x8xf32> -> vector<2x8x8xf32>
    "tpu.trace_stop"() : () -> ()
    %103 = vector.extract_strided_slice %37 {offsets = [0, 0, 16], sizes = [2, 8, 8], strides = [1, 1, 1]} : vector<2x8x128xf32> to vector<2x8x8xf32>
    %104 = arith.truncf %103 : vector<2x8x8xf32> to vector<2x8x8xbf16>
    %105 = vector.extract_strided_slice %37 {offsets = [0, 0, 48], sizes = [2, 8, 8], strides = [1, 1, 1]} : vector<2x8x128xf32> to vector<2x8x8xf32>
    %106 = arith.truncf %105 : vector<2x8x8xf32> to vector<2x8x8xbf16>
    %107 = vector.extract_strided_slice %37 {offsets = [0, 0, 80], sizes = [2, 8, 8], strides = [1, 1, 1]} : vector<2x8x128xf32> to vector<2x8x8xf32>
    %108 = arith.truncf %107 : vector<2x8x8xf32> to vector<2x8x8xbf16>
    "tpu.trace_start"() <{level = 10 : i32, message = "bqd,bkd->bqk"}> : () -> ()
    %cst_32 = arith.constant dense<0.000000e+00> : vector<2x8x8xf32>
    %109 = tpu.matmul %104, %106, %cst_32 {dimension_numbers = #tpu.dot_dimension_numbers<[2], [2], [1], [1], [0, 0, 0, 1, 1, 1], [0], [0]>} : vector<2x8x8xbf16>, vector<2x8x8xbf16>, vector<2x8x8xf32> -> vector<2x8x8xf32>
    "tpu.trace_stop"() : () -> ()
    %110 = arith.addf %109, %62 : vector<2x8x8xf32>
    %cst_33 = arith.constant dense<0xFF800000> : vector<2x8xf32>
    %111 = vector.multi_reduction <maximumf>, %110, %cst_33 [2] : vector<2x8x8xf32> to vector<2x8xf32>
    %112 = vector.shape_cast %111 : vector<2x8xf32> to vector<2x8x1xf32>
    %113 = vector.broadcast %112 : vector<2x8x1xf32> to vector<2x8x8xf32>
    %114 = arith.subf %110, %113 : vector<2x8x8xf32>
    %115 = math.exp %114 : vector<2x8x8xf32>
    %cst_34 = arith.constant dense<0.000000e+00> : vector<2x8xf32>
    %116 = vector.multi_reduction <add>, %115, %cst_34 [2] : vector<2x8x8xf32> to vector<2x8xf32>
    %117 = vector.shape_cast %116 : vector<2x8xf32> to vector<2x8x1xf32>
    %118 = tpu.reciprocal %117 {approx = true} : vector<2x8x1xf32> -> vector<2x8x1xf32>
    %119 = vector.broadcast %118 : vector<2x8x1xf32> to vector<2x8x8xf32>
    %120 = arith.mulf %115, %119 : vector<2x8x8xf32>
    %121 = arith.truncf %120 : vector<2x8x8xf32> to vector<2x8x8xbf16>
    "tpu.trace_start"() <{level = 10 : i32, message = "bqk,bkd->bqd"}> : () -> ()
    %cst_35 = arith.constant dense<0.000000e+00> : vector<2x8x8xf32>
    %122 = tpu.matmul %121, %108, %cst_35 {dimension_numbers = #tpu.dot_dimension_numbers<[2], [1], [1], [2], [0, 0, 0, 1, 1, 2], [0], [0]>} : vector<2x8x8xbf16>, vector<2x8x8xbf16>, vector<2x8x8xf32> -> vector<2x8x8xf32>
    "tpu.trace_stop"() : () -> ()
    %123 = vector.extract_strided_slice %37 {offsets = [0, 0, 24], sizes = [2, 8, 8], strides = [1, 1, 1]} : vector<2x8x128xf32> to vector<2x8x8xf32>
    %124 = arith.truncf %123 : vector<2x8x8xf32> to vector<2x8x8xbf16>
    %125 = vector.extract_strided_slice %37 {offsets = [0, 0, 56], sizes = [2, 8, 8], strides = [1, 1, 1]} : vector<2x8x128xf32> to vector<2x8x8xf32>
    %126 = arith.truncf %125 : vector<2x8x8xf32> to vector<2x8x8xbf16>
    %127 = vector.extract_strided_slice %37 {offsets = [0, 0, 88], sizes = [2, 8, 8], strides = [1, 1, 1]} : vector<2x8x128xf32> to vector<2x8x8xf32>
    %128 = arith.truncf %127 : vector<2x8x8xf32> to vector<2x8x8xbf16>
    "tpu.trace_start"() <{level = 10 : i32, message = "bqd,bkd->bqk"}> : () -> ()
    %cst_36 = arith.constant dense<0.000000e+00> : vector<2x8x8xf32>
    %129 = tpu.matmul %124, %126, %cst_36 {dimension_numbers = #tpu.dot_dimension_numbers<[2], [2], [1], [1], [0, 0, 0, 1, 1, 1], [0], [0]>} : vector<2x8x8xbf16>, vector<2x8x8xbf16>, vector<2x8x8xf32> -> vector<2x8x8xf32>
    "tpu.trace_stop"() : () -> ()
    %130 = arith.addf %129, %62 : vector<2x8x8xf32>
    %cst_37 = arith.constant dense<0xFF800000> : vector<2x8xf32>
    %131 = vector.multi_reduction <maximumf>, %130, %cst_37 [2] : vector<2x8x8xf32> to vector<2x8xf32>
    %132 = vector.shape_cast %131 : vector<2x8xf32> to vector<2x8x1xf32>
    %133 = vector.broadcast %132 : vector<2x8x1xf32> to vector<2x8x8xf32>
    %134 = arith.subf %130, %133 : vector<2x8x8xf32>
    %135 = math.exp %134 : vector<2x8x8xf32>
    %cst_38 = arith.constant dense<0.000000e+00> : vector<2x8xf32>
    %136 = vector.multi_reduction <add>, %135, %cst_38 [2] : vector<2x8x8xf32> to vector<2x8xf32>
    %137 = vector.shape_cast %136 : vector<2x8xf32> to vector<2x8x1xf32>
    %138 = tpu.reciprocal %137 {approx = true} : vector<2x8x1xf32> -> vector<2x8x1xf32>
    %139 = vector.broadcast %138 : vector<2x8x1xf32> to vector<2x8x8xf32>
    %140 = arith.mulf %135, %139 : vector<2x8x8xf32>
    %141 = arith.truncf %140 : vector<2x8x8xf32> to vector<2x8x8xbf16>
    "tpu.trace_start"() <{level = 10 : i32, message = "bqk,bkd->bqd"}> : () -> ()
    %cst_39 = arith.constant dense<0.000000e+00> : vector<2x8x8xf32>
    %142 = tpu.matmul %141, %128, %cst_39 {dimension_numbers = #tpu.dot_dimension_numbers<[2], [1], [1], [2], [0, 0, 0, 1, 1, 2], [0], [0]>} : vector<2x8x8xbf16>, vector<2x8x8xbf16>, vector<2x8x8xf32> -> vector<2x8x8xf32>
    "tpu.trace_stop"() : () -> ()
    %143 = tpu.concatenate %82, %102, %122, %142 in 2 : vector<2x8x8xf32>, vector<2x8x8xf32>, vector<2x8x8xf32>, vector<2x8x8xf32> -> vector<2x8x32xf32>
    %144 = vector.shape_cast %143 : vector<2x8x32xf32> to vector<16x32xf32>
    %145 = arith.truncf %144 : vector<16x32xf32> to vector<16x32xbf16>
    %c0_40 = arith.constant 0 : index
    %c128 = arith.constant 128 : index
    %146 = vector.load %arg4[%c0_40, %c128] : memref<32x384xbf16, #tpu.memory_space<vmem>>, vector<32x32xbf16>
    %cst_41 = arith.constant dense<0.000000e+00> : vector<16x32xf32>
    %147 = tpu.matmul %145, %146, %cst_41 {dimension_numbers = #tpu.dot_dimension_numbers<[1], [0], [0], [1], [0, 0, 1, 1], [], []>} : vector<16x32xbf16>, vector<32x32xbf16>, vector<16x32xf32> -> vector<16x32xf32>
    %148 = vector.broadcast %3 : vector<1x32xf32> to vector<16x32xf32>
    %149 = arith.addf %147, %148 : vector<16x32xf32>
    %150 = arith.addf %9, %149 : vector<16x32xf32>
    %cst_42 = arith.constant dense<0.000000e+00> : vector<16xf32>
    %151 = vector.multi_reduction <add>, %150, %cst_42 [1] : vector<16x32xf32> to vector<16xf32>
    %152 = vector.shape_cast %151 : vector<16xf32> to vector<16x1xf32>
    %cst_43 = arith.constant 3.200000e+01 : f32
    %153 = vector.broadcast %cst_43 : f32 to vector<16x1xf32>
    %154 = arith.divf %152, %153 : vector<16x1xf32>
    %155 = vector.broadcast %154 : vector<16x1xf32> to vector<16x32xf32>
    %156 = arith.subf %150, %155 : vector<16x32xf32>
    %157 = arith.mulf %156, %156 : vector<16x32xf32>
    %cst_44 = arith.constant dense<0.000000e+00> : vector<16xf32>
    %158 = vector.multi_reduction <add>, %157, %cst_44 [1] : vector<16x32xf32> to vector<16xf32>
    %159 = vector.shape_cast %158 : vector<16xf32> to vector<16x1xf32>
    %cst_45 = arith.constant 3.200000e+01 : f32
    %160 = vector.broadcast %cst_45 : f32 to vector<16x1xf32>
    %161 = arith.divf %159, %160 : vector<16x1xf32>
    %162 = vector.broadcast %154 : vector<16x1xf32> to vector<16x32xf32>
    %163 = arith.subf %150, %162 : vector<16x32xf32>
    %cst_46 = arith.constant 9.99999974E-6 : f32
    %164 = vector.broadcast %cst_46 : f32 to vector<16x1xf32>
    %165 = arith.addf %161, %164 : vector<16x1xf32>
    %166 = math.rsqrt %165 : vector<16x1xf32>
    %167 = vector.broadcast %166 : vector<16x1xf32> to vector<16x32xf32>
    %168 = arith.mulf %163, %167 : vector<16x32xf32>
    %169 = vector.broadcast %4 : vector<1x32xf32> to vector<16x32xf32>
    %170 = arith.mulf %168, %169 : vector<16x32xf32>
    %171 = vector.broadcast %5 : vector<1x32xf32> to vector<16x32xf32>
    %172 = arith.addf %170, %171 : vector<16x32xf32>
    %173 = arith.truncf %172 : vector<16x32xf32> to vector<16x32xbf16>
    %c0_47 = arith.constant 0 : index
    %c256 = arith.constant 256 : index
    %174 = vector.load %arg4[%c0_47, %c256] : memref<32x384xbf16, #tpu.memory_space<vmem>>, vector<32x64xbf16>
    %cst_48 = arith.constant dense<0.000000e+00> : vector<16x64xf32>
    %175 = tpu.matmul %173, %174, %cst_48 {dimension_numbers = #tpu.dot_dimension_numbers<[1], [0], [0], [1], [0, 0, 1, 1], [], []>} : vector<16x32xbf16>, vector<32x64xbf16>, vector<16x64xf32> -> vector<16x64xf32>
    %176 = vector.broadcast %6 : vector<1x64xf32> to vector<16x64xf32>
    %177 = arith.addf %175, %176 : vector<16x64xf32>
    %cst_49 = arith.constant 0.000000e+00 : f32
    %178 = vector.broadcast %cst_49 : f32 to vector<16x64xf32>
    %179 = arith.maximumf %177, %178 : vector<16x64xf32>
    %180 = arith.truncf %179 : vector<16x64xf32> to vector<16x64xbf16>
    %c0_50 = arith.constant 0 : index
    %c0_51 = arith.constant 0 : index
    %181 = vector.load %arg5[%c0_50, %c0_51] : memref<64x32xbf16, #tpu.memory_space<vmem>>, vector<64x32xbf16>
    %cst_52 = arith.constant dense<0.000000e+00> : vector<16x32xf32>
    %182 = tpu.matmul %180, %181, %cst_52 {dimension_numbers = #tpu.dot_dimension_numbers<[1], [0], [0], [1], [0, 0, 1, 1], [], []>} : vector<16x64xbf16>, vector<64x32xbf16>, vector<16x32xf32> -> vector<16x32xf32>
    %183 = vector.broadcast %7 : vector<1x32xf32> to vector<16x32xf32>
    %184 = arith.addf %182, %183 : vector<16x32xf32>
    %185 = arith.addf %150, %184 : vector<16x32xf32>
    %186 = vector.shape_cast %185 : vector<16x32xf32> to vector<2x8x32xf32>
    %c0_53 = arith.constant 0 : index
    %c0_54 = arith.constant 0 : index
    %c0_55 = arith.constant 0 : index
    %187 = vector.load %arg6[%c0_53, %c0_54, %c0_55] : memref<2x8x32xf32, #tpu.memory_space<vmem>>, vector<2x8x32xf32>
    tpu.vector_store %arg6[%c0_53, %c0_54, %c0_55], %186 {strides = array<i32>} : memref<2x8x32xf32, #tpu.memory_space<vmem>>, vector<2x8x32xf32>,
    return
  }
  func.func @transform_0(%arg0: i32, %arg1: memref<2xi32, #tpu.memory_space<smem>>) -> (i32, i32, i32) {
    %c0_i32 = arith.constant 0 : i32
    %c0_i32_0 = arith.constant 0 : i32
    %c0_i32_1 = arith.constant 0 : i32
    return %arg0, %c0_i32, %c0_i32_0 : i32, i32, i32
  }
  func.func @transform_1(%arg0: i32, %arg1: memref<2xi32, #tpu.memory_space<smem>>) -> (i32, i32) {
    %c0_i32 = arith.constant 0 : i32
    %c0_i32_0 = arith.constant 0 : i32
    %c0_i32_1 = arith.constant 0 : i32
    return %c0_i32, %c0_i32_0 : i32, i32
  }
  func.func @transform_2(%arg0: i32, %arg1: memref<2xi32, #tpu.memory_space<smem>>) -> (i32, i32) {
    %c0_i32 = arith.constant 0 : i32
    %c0_i32_0 = arith.constant 0 : i32
    %c0_i32_1 = arith.constant 0 : i32
    return %c0_i32, %c0_i32_0 : i32, i32
  }
  func.func @transform_3(%arg0: i32, %arg1: memref<2xi32, #tpu.memory_space<smem>>) -> (i32, i32) {
    %c0_i32 = arith.constant 0 : i32
    %c0_i32_0 = arith.constant 0 : i32
    %c0_i32_1 = arith.constant 0 : i32
    return %c0_i32, %c0_i32_0 : i32, i32
  }
  func.func @transform_4(%arg0: i32, %arg1: memref<2xi32, #tpu.memory_space<smem>>) -> (i32, i32, i32) {
    %c0_i32 = arith.constant 0 : i32
    %c0_i32_0 = arith.constant 0 : i32
    %c0_i32_1 = arith.constant 0 : i32
    return %arg0, %c0_i32, %c0_i32_0 : i32, i32, i32
  }
}

</mosaic_0001>

<llo_original>
// kernel: tpu_custom_call.1
$region0: #{tpu_custom_call.1}
  #allocation0 [shape = 'u32[]', space=smem, size = 0x4, offset = 0x4, fixed_abs, tag = 'smem constant byte address 0x4 - core index']
  #allocation1 [shape = 'u32[144,128]{1,0:T(1,128)}', space=vmem, size = 0x12000, scoped, tag = 'internal scratch']
  #allocation2 [shape = 's32[1]{0}', space=sflag, size = 0x4, scoped, tag = 'scoped memory for tpu_custom_call.1']
  #allocation3 [shape = 'u8[512]{0}', space=smem, size = 0x200, scoped, tag = 'prefetched SMEM operand 0']
  %s0 = inlined_call_operand.vmem [shape: s32[2], index: 0, kind: input, shape index: {}]
  %s1 = inlined_call_operand.hbm [shape: f32[2,8,32], index: 1, kind: input, shape index: {}]
  %s2 = inlined_call_operand.vmem [shape: f32[8,128], index: 2, kind: input, shape index: {}]
  %s3 = inlined_call_operand.vmem [shape: bf16[32,384], index: 3, kind: input, shape index: {}]
  %s4 = inlined_call_operand.vmem [shape: bf16[64,32], index: 4, kind: input, shape index: {}]
  %s5 = inlined_call_operand.hbm [shape: f32[2,8,32], index: 5, kind: output, shape index: {}]
  %s6 = sld [smem:[#allocation0]]
  $region30: #{tpu_custom_call.1} parent=0
    _
  %s8 = ssub.s32 1, %s6
  %s9 = scalar_select 0, %s8, %s6
  %s10 = sshll.u32 %s0, 4
  %s11 = int_to_ptr.vmem [resolvable:$true] %s10
  %13 = dma.vmem_to_smem %s11, 16, [#allocation3], [#allocation2]
  %14 = dma.done [#allocation2], 16
  %15 = sfence
  $region1: #{tpu_custom_call.1} parent=0
    #allocation4 [shape = 'u8[8192]{0}', space=vmem, size = 0x2000, scoped, tag = 'input window, operand 1, single buffered']
    #allocation5 [shape = 's32[1]{0}', space=sflag, size = 0x4, scoped, tag = 'scoped memory for tpu_custom_call.1']
    #allocation6 [shape = 's32[1]{0}', space=sflag, size = 0x4, scoped, tag = 'scoped memory for tpu_custom_call.1']
    #allocation7 [shape = 'u8[8192]{0}', space=vmem, size = 0x2000, scoped, tag = 'output window, operand 0, single buffered']
    %16 = vsyncpa [#allocation5], 0
    %17 = vsyncpa [#allocation6], 0
    // Predicated region
    $region2: #{tpu_custom_call.1} parent=1 // pred_check
      _
    $region3: #{tpu_custom_call.1} parent=1 // pred_check_branch
      %19 = sbr.rel (0) target = $region5
    $region4: #{tpu_custom_call.1} parent=1 // pred_region
      %s21 = ssub.s32 256, 256
      %22 = vsyncadd [#allocation5], %s21
      %s23 = sshll.u32 [#allocation4], 4
      %s24 = int_to_ptr.vmem [resolvable:$true] %s23
      %29 = dma.hbm_to_vmem [thread:$0]  %s1, 256, %s24, [#allocation5], 128, 128, 8
    $region5: #{tpu_custom_call.1} parent=1 // pred_fallthru
      _
    // Predicated region
    $region6: #{tpu_custom_call.1} parent=1 // pred_check
      _
    $region7: #{tpu_custom_call.1} parent=1 // pred_check_branch
      %31 = sbr.rel (0) target = $region9
    $region8: #{tpu_custom_call.1} parent=1 // pred_region
      _
    $region9: #{tpu_custom_call.1} parent=1 // pred_fallthru
      _
    // Predicated region
    $region10: #{tpu_custom_call.1} parent=1 // pred_check
      _
    $region11: #{tpu_custom_call.1} parent=1 // pred_check_branch
      %33 = sbr.rel (0) target = $region13
    $region12: #{tpu_custom_call.1} parent=1 // pred_region
      _
    $region13: #{tpu_custom_call.1} parent=1 // pred_fallthru
      _
    // Predicated region
    $region14: #{tpu_custom_call.1} parent=1 // pred_check
      _
    $region15: #{tpu_custom_call.1} parent=1 // pred_check_branch
      %35 = sbr.rel (0) target = $region17
    $region16: #{tpu_custom_call.1} parent=1 // pred_region
      _
    $region17: #{tpu_custom_call.1} parent=1 // pred_fallthru
      _
    // Predicated region
    $region18: #{tpu_custom_call.1} parent=1 // pred_check
      _
    $region19: #{tpu_custom_call.1} parent=1 // pred_check_branch
      %37 = sbr.rel (0) target = $region21
    $region20: #{tpu_custom_call.1} parent=1 // pred_region
      %38 = dma.done [#allocation5], 256
    $region21: #{tpu_custom_call.1} parent=1 // pred_fallthru
      _
    %v40 = vld [vmem:[%s2] sm:$0x1]
    %v41 = vld [vmem:[%s2 + $0x1] sm:$0x1]
    %v42 = vld [vmem:[%s2 + $0x2] sm:$0x1]
    %v43 = vld [vmem:[%s2 + $0x3] sm:$0x1]
    %v44 = vld [vmem:[%s2 + $0x4] sm:$0x1]
    %v45 = vld [vmem:[%s2 + $0x5] sm:$0x1]
    %v46 = vld [vmem:[%s2 + $0x6] sm:$0x1]
    %v47 = vld [vmem:[%s2 + $0x7] sm:$0x1]
    %v48 = vld [vmem:[#allocation4] sm:$0xff]
    %v49 = vld [vmem:[#allocation4 + $0x8] sm:$0xff]
    %vm50 = vcmask 261120
    %v51 = vsel %vm50, %v48, 0.0
    %52 = vadd.xlane.f32.xlu0 %v51
    %v53 = vpop.xlane.xlu0 %52
    %v54 = vsel %vm50, %v49, 0.0
    %55 = vadd.xlane.f32.xlu0 %v54
    %v56 = vpop.xlane.xlu0 %55
    %v57 = vrcp.pop 32.0
    %v58 = vmul.f32 %v53, %v57
    %v59 = vmul.f32 %v56, %v57
    %v60 = vsub.f32 %v48, %v58
    %v61 = vsub.f32 %v49, %v59
    %v62 = vmul.f32 %v60, %v60
    %v63 = vmul.f32 %v61, %v61
    %v64 = vsel %vm50, %v62, 0.0
    %65 = vadd.xlane.f32.xlu0 %v64
    %v66 = vpop.xlane.xlu0 %65
    %v67 = vsel %vm50, %v63, 0.0
    %68 = vadd.xlane.f32.xlu0 %v67
    %v69 = vpop.xlane.xlu0 %68
    %v70 = vmul.f32 %v66, %v57
    %v71 = vmul.f32 %v69, %v57
    %v72 = vadd.f32 %v70, 1e-05
    %v73 = vadd.f32 %v71, 1e-05
    %v74 = vrsqrt.pop %v72
    %v75 = vrsqrt.pop %v73
    %v76 = vmul.f32 %v60, %v74
    %v77 = vmul.f32 %v61, %v75
    %v78 = vlaneseq
    %v79 = vshrl.u32 %v78, 7
    %v80 = vsub.s32 0, %v79
    %v81 = vrot.slane %v40, %v80
    %v82 = vmul.f32 %v76, %v81
    %v83 = vmul.f32 %v77, %v81
    %v84 = vlaneseq
    %v85 = vshrl.u32 %v84, 7
    %v86 = vsub.s32 0, %v85
    %v87 = vrot.slane %v41, %v86
    %v88 = vadd.f32 %v82, %v87
    %v89 = vadd.f32 %v83, %v87
    %v90 = vpack.c.bf16 %v89, %v88
    %v91 = vld [vmem:[%s3] sm:$0xf]
    %v92 = vld [vmem:[%s3 + $0xc] sm:$0xf]
    %v93 = vld [vmem:[%s3 + $0x18] sm:$0xf]
    %v94 = vld [vmem:[%s3 + $0x24] sm:$0xf]
    %v95 = vlaneseq
    %v96 = vshrl.u32 %v95, 7
    %v97 = vsub.s32 0, %v96
    %v98 = vrot.slane %v42, %v97
    %v103 = vunpack.c.l.b16 %v91
    %v104 = vunpack.c.l.b16 %v92
    %v105 = vunpack.c.l.b16 %v93
    %v106 = vunpack.c.l.b16 %v94
    %v107 = vpack.c.b16 %v104, %v103
    %v108 = vpack.c.b16 %v106, %v105
    %v112 = vsel %vm50, %v90, 0
    %114 = vmatprep.subr.bf16.mxu0 0
    %115 = vmatpush1.bf16.msra.mxu0 %v107
    %116 = vmatprep.subr.bf16.mxu0 0
    %117 = vmatpush1.bf16.msra.mxu0 %v108
    %118 = vmatprep.subr.bf16.mxu0 0
    %119 = vmatpush1.bf16.msra.mxu0 0
    %120 = vmatprep.subr.bf16.mxu0 0
    %121 = vmatpush1.bf16.msra.mxu0 0
    %122 = vmatprep.subr.bf16.mxu0 0
    %123 = vmatpush1.bf16.msra.mxu0 0
    %124 = vmatprep.subr.bf16.mxu0 0
    %125 = vmatpush1.bf16.msra.mxu0 0
    %126 = vmatprep.subr.bf16.mxu0 0
    %127 = vmatpush1.bf16.msra.mxu0 0
    %128 = vmatprep.subr.bf16.mxu0 0
    %129 = vmatpush1.bf16.msra.mxu0 0
    %130 = vmatprep.subr.bf16.mxu0 0
    %131 = vmatpush1.bf16.msra.mxu0 0
    %132 = vmatprep.subr.bf16.mxu0 0
    %133 = vmatpush1.bf16.msra.mxu0 0
    %134 = vmatprep.subr.bf16.mxu0 0
    %135 = vmatpush1.bf16.msra.mxu0 0
    %136 = vmatprep.subr.bf16.mxu0 0
    %137 = vmatpush1.bf16.msra.mxu0 0
    %138 = vmatprep.subr.bf16.mxu0 0
    %139 = vmatpush1.bf16.msra.mxu0 0
    %140 = vmatprep.subr.bf16.mxu0 0
    %141 = vmatpush1.bf16.msra.mxu0 0
    %142 = vmatprep.subr.bf16.mxu0 0
    %143 = vmatpush1.bf16.msra.mxu0 0
    %144 = vmatprep.subr.bf16.mxu0 0
    %145 = vmatpush1.bf16.msra.mxu0 0
    %146 = vmatprep.mubr.bf16.mxu0 0
    %147 = vmatmul.mubr.bf16.gmra.mrb[0].mxu0 %v112
    %v148 = vpop.f32.mrb[0].mxu0
    %v149 = vadd.f32 %v98, %v148
    %v150 = vpop.f32.mrb[0].mxu0
    %v151 = vpop.f32.mrb[0].mxu0
    %v152 = vadd.f32 %v98, %v151
    %v153 = vpop.f32.mrb[0].mxu0
    %154 = vdwg.mxu0
    %v155 = vlaneseq
    %v156 = vand.u32 %v155, 127
    %s157 = smul.u32 0, 2
    %s158 = sld [smem:[#allocation3 + %s157]]
    %v159 = vstv %s158
    %vm160 = vcmp.ge.s32.totalorder %v156, %v159
    %vm161 = vmand 1, %vm160
    %vm162 = vmand 0, %vm160
    %v163 = vsel %vm161, -1e+30, 0.0
    %v164 = vsel %vm162, -1e+30, 0.0
    %s165 = sadd.s32 %s157, 1
    %s166 = sld [smem:[#allocation3 + %s165]]
    %v167 = vstv %s166
    %vm168 = vcmp.ge.s32.totalorder %v156, %v167
    %vm169 = vmand 0, %vm168
    %vm170 = vmand 1, %vm168
    %v171 = vsel %vm169, -1e+30, %v163
    %v172 = vsel %vm170, -1e+30, %v164
    %v173 = vpack.c.bf16 %v149, %v149
    %v174 = vpack.c.bf16 %v152, %v152
    %176 = vrot.lane.b32.xlu0 %v173, 96
    %v177 = vpop.permute.xlu0 %176
    %vm178 = vcmask 64512
    %v180 = vsel %vm178, %v173, 0
    %v183 = vsel %vm178, %v177, 0
    %185 = vmatprep.subr.bf16.mxu0 0
    %186 = vmatpush1.bf16.xpose.msra.mxu0 %v183
    %187 = vmatprep.subr.bf16.mxu0 0
    %188 = vmatpush1.bf16.xpose.msra.mxu0 0
    %189 = vmatprep.subr.bf16.mxu0 0
    %190 = vmatpush1.bf16.xpose.msra.mxu0 0
    %191 = vmatprep.subr.bf16.mxu0 0
    %192 = vmatpush1.bf16.xpose.msra.mxu0 0
    %193 = vmatprep.subr.bf16.mxu0 0
    %194 = vmatpush1.bf16.xpose.msra.mxu0 0
    %195 = vmatprep.subr.bf16.mxu0 0
    %196 = vmatpush1.bf16.xpose.msra.mxu0 0
    %197 = vmatprep.subr.bf16.mxu0 0
    %198 = vmatpush1.bf16.xpose.msra.mxu0 0
    %199 = vmatprep.subr.bf16.mxu0 0
    %200 = vmatpush1.bf16.xpose.msra.mxu0 0
    %201 = vmatprep.subr.bf16.mxu0 0
    %202 = vmatpush1.bf16.xpose.msra.mxu0 0
    %203 = vmatprep.subr.bf16.mxu0 0
    %204 = vmatpush1.bf16.xpose.msra.mxu0 0
    %205 = vmatprep.subr.bf16.mxu0 0
    %206 = vmatpush1.bf16.xpose.msra.mxu0 0
    %207 = vmatprep.subr.bf16.mxu0 0
    %208 = vmatpush1.bf16.xpose.msra.mxu0 0
    %209 = vmatprep.subr.bf16.mxu0 0
    %210 = vmatpush1.bf16.xpose.msra.mxu0 0
    %211 = vmatprep.subr.bf16.mxu0 0
    %212 = vmatpush1.bf16.xpose.msra.mxu0 0
    %213 = vmatprep.subr.bf16.mxu0 0
    %214 = vmatpush1.bf16.xpose.msra.mxu0 0
    %215 = vmatprep.subr.bf16.mxu0 0
    %216 = vmatpush1.bf16.xpose.msra.mxu0 0
    %217 = vmatprep.mubr.bf16.mxu0 0
    %218 = vmatmul.mubr.bf16.gmra.mrb[0].mxu0 %v180
    %v219 = vpop.f32.mrb[0].mxu0
    %v220 = vadd.f32 %v171, %v219
    %v221 = vpop.f32.mrb[0].mxu0
    %v222 = vpop.f32.mrb[0].mxu0
    %v223 = vpop.f32.mrb[0].mxu0
    %224 = vdwg.mxu0
    %226 = vrot.lane.b32.xlu0 %v174, 96
    %v227 = vpop.permute.xlu0 %226
    %v229 = vsel %vm178, %v174, 0
    %v232 = vsel %vm178, %v227, 0
    %234 = vmatprep.subr.bf16.mxu0 0
    %235 = vmatpush1.bf16.xpose.msra.mxu0 %v232
    %236 = vmatprep.subr.bf16.mxu0 0
    %237 = vmatpush1.bf16.xpose.msra.mxu0 0
    %238 = vmatprep.subr.bf16.mxu0 0
    %239 = vmatpush1.bf16.xpose.msra.mxu0 0
    %240 = vmatprep.subr.bf16.mxu0 0
    %241 = vmatpush1.bf16.xpose.msra.mxu0 0
    %242 = vmatprep.subr.bf16.mxu0 0
    %243 = vmatpush1.bf16.xpose.msra.mxu0 0
    %244 = vmatprep.subr.bf16.mxu0 0
    %245 = vmatpush1.bf16.xpose.msra.mxu0 0
    %246 = vmatprep.subr.bf16.mxu0 0
    %247 = vmatpush1.bf16.xpose.msra.mxu0 0
    %248 = vmatprep.subr.bf16.mxu0 0
    %249 = vmatpush1.bf16.xpose.msra.mxu0 0
    %250 = vmatprep.subr.bf16.mxu0 0
    %251 = vmatpush1.bf16.xpose.msra.mxu0 0
    %252 = vmatprep.subr.bf16.mxu0 0
    %253 = vmatpush1.bf16.xpose.msra.mxu0 0
    %254 = vmatprep.subr.bf16.mxu0 0
    %255 = vmatpush1.bf16.xpose.msra.mxu0 0
    %256 = vmatprep.subr.bf16.mxu0 0
    %257 = vmatpush1.bf16.xpose.msra.mxu0 0
    %258 = vmatprep.subr.bf16.mxu0 0
    %259 = vmatpush1.bf16.xpose.msra.mxu0 0
    %260 = vmatprep.subr.bf16.mxu0 0
    %261 = vmatpush1.bf16.xpose.msra.mxu0 0
    %262 = vmatprep.subr.bf16.mxu0 0
    %263 = vmatpush1.bf16.xpose.msra.mxu0 0
    %264 = vmatprep.subr.bf16.mxu0 0
    %265 = vmatpush1.bf16.xpose.msra.mxu0 0
    %266 = vmatprep.mubr.bf16.mxu0 0
    %267 = vmatmul.mubr.bf16.gmra.mrb[0].mxu0 %v229
    %v268 = vpop.f32.mrb[0].mxu0
    %v269 = vadd.f32 %v172, %v268
    %v270 = vpop.f32.mrb[0].mxu0
    %v271 = vpop.f32.mrb[0].mxu0
    %v272 = vpop.f32.mrb[0].mxu0
    %273 = vdwg.mxu0
    %v274 = vsel %vm178, %v220, -inf
    %275 = vmax.xlane.f32.xlu0 %v274
    %v276 = vpop.xlane.xlu0 %275
    %v277 = vsel %vm178, %v269, -inf
    %278 = vmax.xlane.f32.xlu0 %v277
    %v279 = vpop.xlane.xlu0 %278
    %v280 = vsub.f32 %v220, %v276
    %v281 = vsub.f32 %v269, %v279
    %v282 = vmul.f32 %v280, 1.442695
    %v283 = vpow.pop %v282
    %v284 = vmul.f32 %v281, 1.442695
    %v285 = vpow.pop %v284
    %v286 = vsel %vm178, %v283, 0.0
    %287 = vadd.xlane.f32.xlu0 %v286
    %v288 = vpop.xlane.xlu0 %287
    %v289 = vsel %vm178, %v285, 0.0
    %290 = vadd.xlane.f32.xlu0 %v289
    %v291 = vpop.xlane.xlu0 %290
    %v292 = vrcp.pop %v288
    %v293 = vrcp.pop %v291
    %v294 = vmul.f32 %v283, %v292
    %v295 = vmul.f32 %v285, %v293
    %v296 = vpack.c.bf16 %v294, %v294
    %v297 = vpack.c.bf16 %v295, %v295
    %298 = vrot.lane.b32.xlu0 %v173, 64
    %v299 = vpop.permute.xlu0 %298
    %v301 = vsel %vm178, %v296, 0
    %vm303 = vcmask 1043456
    %v305 = vsel %vm303, %v299, 0
    %307 = vmatprep.subr.bf16.mxu0 0
    %308 = vmatpush1.bf16.msra.mxu0 %v305
    %309 = vmatprep.subr.bf16.mxu0 0
    %310 = vmatpush1.bf16.msra.mxu0 0
    %311 = vmatprep.subr.bf16.mxu0 0
    %312 = vmatpush1.bf16.msra.mxu0 0
    %313 = vmatprep.subr.bf16.mxu0 0
    %314 = vmatpush1.bf16.msra.mxu0 0
    %315 = vmatprep.subr.bf16.mxu0 0
    %316 = vmatpush1.bf16.msra.mxu0 0
    %317 = vmatprep.subr.bf16.mxu0 0
    %318 = vmatpush1.bf16.msra.mxu0 0
    %319 = vmatprep.subr.bf16.mxu0 0
    %320 = vmatpush1.bf16.msra.mxu0 0
    %321 = vmatprep.subr.bf16.mxu0 0
    %322 = vmatpush1.bf16.msra.mxu0 0
    %323 = vmatprep.subr.bf16.mxu0 0
    %324 = vmatpush1.bf16.msra.mxu0 0
    %325 = vmatprep.subr.bf16.mxu0 0
    %326 = vmatpush1.bf16.msra.mxu0 0
    %327 = vmatprep.subr.bf16.mxu0 0
    %328 = vmatpush1.bf16.msra.mxu0 0
    %329 = vmatprep.subr.bf16.mxu0 0
    %330 = vmatpush1.bf16.msra.mxu0 0
    %331 = vmatprep.subr.bf16.mxu0 0
    %332 = vmatpush1.bf16.msra.mxu0 0
    %333 = vmatprep.subr.bf16.mxu0 0
    %334 = vmatpush1.bf16.msra.mxu0 0
    %335 = vmatprep.subr.bf16.mxu0 0
    %336 = vmatpush1.bf16.msra.mxu0 0
    %337 = vmatprep.subr.bf16.mxu0 0
    %338 = vmatpush1.bf16.msra.mxu0 0
    %339 = vmatprep.mubr.bf16.mxu0 0
    %340 = vmatmul.mubr.bf16.gmra.mrb[0].mxu0 %v301
    %v341 = vpop.f32.mrb[0].mxu0
    %v342 = vadd.f32 0.0, %v341
    %v343 = vpop.f32.mrb[0].mxu0
    %v344 = vpop.f32.mrb[0].mxu0
    %v345 = vpop.f32.mrb[0].mxu0
    %346 = vdwg.mxu0
    %347 = vrot.lane.b32.xlu0 %v174, 64
    %v348 = vpop.permute.xlu0 %347
    %v350 = vsel %vm178, %v297, 0
    %v353 = vsel %vm303, %v348, 0
    %355 = vmatprep.subr.bf16.mxu0 0
    %356 = vmatpush1.bf16.msra.mxu0 %v353
    %357 = vmatprep.subr.bf16.mxu0 0
    %358 = vmatpush1.bf16.msra.mxu0 0
    %359 = vmatprep.subr.bf16.mxu0 0
    %360 = vmatpush1.bf16.msra.mxu0 0
    %361 = vmatprep.subr.bf16.mxu0 0
    %362 = vmatpush1.bf16.msra.mxu0 0
    %363 = vmatprep.subr.bf16.mxu0 0
    %364 = vmatpush1.bf16.msra.mxu0 0
    %365 = vmatprep.subr.bf16.mxu0 0
    %366 = vmatpush1.bf16.msra.mxu0 0
    %367 = vmatprep.subr.bf16.mxu0 0
    %368 = vmatpush1.bf16.msra.mxu0 0
    %369 = vmatprep.subr.bf16.mxu0 0
    %370 = vmatpush1.bf16.msra.mxu0 0
    %371 = vmatprep.subr.bf16.mxu0 0
    %372 = vmatpush1.bf16.msra.mxu0 0
    %373 = vmatprep.subr.bf16.mxu0 0
    %374 = vmatpush1.bf16.msra.mxu0 0
    %375 = vmatprep.subr.bf16.mxu0 0
    %376 = vmatpush1.bf16.msra.mxu0 0
    %377 = vmatprep.subr.bf16.mxu0 0
    %378 = vmatpush1.bf16.msra.mxu0 0
    %379 = vmatprep.subr.bf16.mxu0 0
    %380 = vmatpush1.bf16.msra.mxu0 0
    %381 = vmatprep.subr.bf16.mxu0 0
    %382 = vmatpush1.bf16.msra.mxu0 0
    %383 = vmatprep.subr.bf16.mxu0 0
    %384 = vmatpush1.bf16.msra.mxu0 0
    %385 = vmatprep.subr.bf16.mxu0 0
    %386 = vmatpush1.bf16.msra.mxu0 0
    %387 = vmatprep.mubr.bf16.mxu0 0
    %388 = vmatmul.mubr.bf16.gmra.mrb[0].mxu0 %v350
    %v389 = vpop.f32.mrb[0].mxu0
    %v390 = vadd.f32 0.0, %v389
    %v391 = vpop.f32.mrb[0].mxu0
    %v392 = vpop.f32.mrb[0].mxu0
    %v393 = vpop.f32.mrb[0].mxu0
    %394 = vdwg.mxu0
    %395 = vrot.lane.b32.xlu0 %v173, 120
    %v396 = vpop.permute.xlu0 %395
    %397 = vrot.lane.b32.xlu0 %v173, 88
    %v398 = vpop.permute.xlu0 %397
    %v400 = vsel %vm178, %v396, 0
    %v403 = vsel %vm178, %v398, 0
    %405 = vmatprep.subr.bf16.mxu0 0
    %406 = vmatpush1.bf16.xpose.msra.mxu0 %v403
    %407 = vmatprep.subr.bf16.mxu0 0
    %408 = vmatpush1.bf16.xpose.msra.mxu0 0
    %409 = vmatprep.subr.bf16.mxu0 0
    %410 = vmatpush1.bf16.xpose.msra.mxu0 0
    %411 = vmatprep.subr.bf16.mxu0 0
    %412 = vmatpush1.bf16.xpose.msra.mxu0 0
    %413 = vmatprep.subr.bf16.mxu0 0
    %414 = vmatpush1.bf16.xpose.msra.mxu0 0
    %415 = vmatprep.subr.bf16.mxu0 0
    %416 = vmatpush1.bf16.xpose.msra.mxu0 0
    %417 = vmatprep.subr.bf16.mxu0 0
    %418 = vmatpush1.bf16.xpose.msra.mxu0 0
    %419 = vmatprep.subr.bf16.mxu0 0
    %420 = vmatpush1.bf16.xpose.msra.mxu0 0
    %421 = vmatprep.subr.bf16.mxu0 0
    %422 = vmatpush1.bf16.xpose.msra.mxu0 0
    %423 = vmatprep.subr.bf16.mxu0 0
    %424 = vmatpush1.bf16.xpose.msra.mxu0 0
    %425 = vmatprep.subr.bf16.mxu0 0
    %426 = vmatpush1.bf16.xpose.msra.mxu0 0
    %427 = vmatprep.subr.bf16.mxu0 0
    %428 = vmatpush1.bf16.xpose.msra.mxu0 0
    %429 = vmatprep.subr.bf16.mxu0 0
    %430 = vmatpush1.bf16.xpose.msra.mxu0 0
    %431 = vmatprep.subr.bf16.mxu0 0
    %432 = vmatpush1.bf16.xpose.msra.mxu0 0
    %433 = vmatprep.subr.bf16.mxu0 0
    %434 = vmatpush1.bf16.xpose.msra.mxu0 0
    %435 = vmatprep.subr.bf16.mxu0 0
    %436 = vmatpush1.bf16.xpose.msra.mxu0 0
    %437 = vmatprep.mubr.bf16.mxu0 0
    %438 = vmatmul.mubr.bf16.gmra.mrb[0].mxu0 %v400
    %v439 = vpop.f32.mrb[0].mxu0
    %v440 = vadd.f32 %v171, %v439
    %v441 = vpop.f32.mrb[0].mxu0
    %v442 = vpop.f32.mrb[0].mxu0
    %v443 = vpop.f32.mrb[0].mxu0
    %444 = vdwg.mxu0
    %445 = vrot.lane.b32.xlu0 %v174, 120
    %v446 = vpop.permute.xlu0 %445
    %447 = vrot.lane.b32.xlu0 %v174, 88
    %v448 = vpop.permute.xlu0 %447
    %v450 = vsel %vm178, %v446, 0
    %v453 = vsel %vm178, %v448, 0
    %455 = vmatprep.subr.bf16.mxu0 0
    %456 = vmatpush1.bf16.xpose.msra.mxu0 %v453
    %457 = vmatprep.subr.bf16.mxu0 0
    %458 = vmatpush1.bf16.xpose.msra.mxu0 0
    %459 = vmatprep.subr.bf16.mxu0 0
    %460 = vmatpush1.bf16.xpose.msra.mxu0 0
    %461 = vmatprep.subr.bf16.mxu0 0
    %462 = vmatpush1.bf16.xpose.msra.mxu0 0
    %463 = vmatprep.subr.bf16.mxu0 0
    %464 = vmatpush1.bf16.xpose.msra.mxu0 0
    %465 = vmatprep.subr.bf16.mxu0 0
    %466 = vmatpush1.bf16.xpose.msra.mxu0 0
    %467 = vmatprep.subr.bf16.mxu0 0
    %468 = vmatpush1.bf16.xpose.msra.mxu0 0
    %469 = vmatprep.subr.bf16.mxu0 0
    %470 = vmatpush1.bf16.xpose.msra.mxu0 0
    %471 = vmatprep.subr.bf16.mxu0 0
    %472 = vmatpush1.bf16.xpose.msra.mxu0 0
    %473 = vmatprep.subr.bf16.mxu0 0
    %474 = vmatpush1.bf16.xpose.msra.mxu0 0
    %475 = vmatprep.subr.bf16.mxu0 0
    %476 = vmatpush1.bf16.xpose.msra.mxu0 0
    %477 = vmatprep.subr.bf16.mxu0 0
    %478 = vmatpush1.bf16.xpose.msra.mxu0 0
    %479 = vmatprep.subr.bf16.mxu0 0
    %480 = vmatpush1.bf16.xpose.msra.mxu0 0
    %481 = vmatprep.subr.bf16.mxu0 0
    %482 = vmatpush1.bf16.xpose.msra.mxu0 0
    %483 = vmatprep.subr.bf16.mxu0 0
    %484 = vmatpush1.bf16.xpose.msra.mxu0 0
    %485 = vmatprep.subr.bf16.mxu0 0
    %486 = vmatpush1.bf16.xpose.msra.mxu0 0
    %487 = vmatprep.mubr.bf16.mxu0 0
    %488 = vmatmul.mubr.bf16.gmra.mrb[0].mxu0 %v450
    %v489 = vpop.f32.mrb[0].mxu0
    %v490 = vadd.f32 %v172, %v489
    %v491 = vpop.f32.mrb[0].mxu0
    %v492 = vpop.f32.mrb[0].mxu0
    %v493 = vpop.f32.mrb[0].mxu0
    %494 = vdwg.mxu0
    %v495 = vsel %vm178, %v440, -inf
    %496 = vmax.xlane.f32.xlu0 %v495
    %v497 = vpop.xlane.xlu0 %496
    %v498 = vsel %vm178, %v490, -inf
    %499 = vmax.xlane.f32.xlu0 %v498
    %v500 = vpop.xlane.xlu0 %499
    %v501 = vsub.f32 %v440, %v497
    %v502 = vsub.f32 %v490, %v500
    %v503 = vmul.f32 %v501, 1.442695
    %v504 = vpow.pop %v503
    %v505 = vmul.f32 %v502, 1.442695
    %v506 = vpow.pop %v505
    %v507 = vsel %vm178, %v504, 0.0
    %508 = vadd.xlane.f32.xlu0 %v507
    %v509 = vpop.xlane.xlu0 %508
    %v510 = vsel %vm178, %v506, 0.0
    %511 = vadd.xlane.f32.xlu0 %v510
    %v512 = vpop.xlane.xlu0 %511
    %v513 = vrcp.pop %v509
    %v514 = vrcp.pop %v512
    %v515 = vmul.f32 %v504, %v513
    %v516 = vmul.f32 %v506, %v514
    %v517 = vpack.c.bf16 %v515, %v515
    %v518 = vpack.c.bf16 %v516, %v516
    %519 = vrot.lane.b32.xlu0 %v173, 56
    %v520 = vpop.permute.xlu0 %519
    %v522 = vsel %vm178, %v517, 0
    %v525 = vsel %vm303, %v520, 0
    %527 = vmatprep.subr.bf16.mxu0 0
    %528 = vmatpush1.bf16.msra.mxu0 %v525
    %529 = vmatprep.subr.bf16.mxu0 0
    %530 = vmatpush1.bf16.msra.mxu0 0
    %531 = vmatprep.subr.bf16.mxu0 0
    %532 = vmatpush1.bf16.msra.mxu0 0
    %533 = vmatprep.subr.bf16.mxu0 0
    %534 = vmatpush1.bf16.msra.mxu0 0
    %535 = vmatprep.subr.bf16.mxu0 0
    %536 = vmatpush1.bf16.msra.mxu0 0
    %537 = vmatprep.subr.bf16.mxu0 0
    %538 = vmatpush1.bf16.msra.mxu0 0
    %539 = vmatprep.subr.bf16.mxu0 0
    %540 = vmatpush1.bf16.msra.mxu0 0
    %541 = vmatprep.subr.bf16.mxu0 0
    %542 = vmatpush1.bf16.msra.mxu0 0
    %543 = vmatprep.subr.bf16.mxu0 0
    %544 = vmatpush1.bf16.msra.mxu0 0
    %545 = vmatprep.subr.bf16.mxu0 0
    %546 = vmatpush1.bf16.msra.mxu0 0
    %547 = vmatprep.subr.bf16.mxu0 0
    %548 = vmatpush1.bf16.msra.mxu0 0
    %549 = vmatprep.subr.bf16.mxu0 0
    %550 = vmatpush1.bf16.msra.mxu0 0
    %551 = vmatprep.subr.bf16.mxu0 0
    %552 = vmatpush1.bf16.msra.mxu0 0
    %553 = vmatprep.subr.bf16.mxu0 0
    %554 = vmatpush1.bf16.msra.mxu0 0
    %555 = vmatprep.subr.bf16.mxu0 0
    %556 = vmatpush1.bf16.msra.mxu0 0
    %557 = vmatprep.subr.bf16.mxu0 0
    %558 = vmatpush1.bf16.msra.mxu0 0
    %559 = vmatprep.mubr.bf16.mxu0 0
    %560 = vmatmul.mubr.bf16.gmra.mrb[0].mxu0 %v522
    %v561 = vpop.f32.mrb[0].mxu0
    %v562 = vadd.f32 0.0, %v561
    %v563 = vpop.f32.mrb[0].mxu0
    %v564 = vpop.f32.mrb[0].mxu0
    %v565 = vpop.f32.mrb[0].mxu0
    %566 = vdwg.mxu0
    %567 = vrot.lane.b32.xlu0 %v174, 56
    %v568 = vpop.permute.xlu0 %567
    %v570 = vsel %vm178, %v518, 0
    %v573 = vsel %vm303, %v568, 0
    %575 = vmatprep.subr.bf16.mxu0 0
    %576 = vmatpush1.bf16.msra.mxu0 %v573
    %577 = vmatprep.subr.bf16.mxu0 0
    %578 = vmatpush1.bf16.msra.mxu0 0
    %579 = vmatprep.subr.bf16.mxu0 0
    %580 = vmatpush1.bf16.msra.mxu0 0
    %581 = vmatprep.subr.bf16.mxu0 0
    %582 = vmatpush1.bf16.msra.mxu0 0
    %583 = vmatprep.subr.bf16.mxu0 0
    %584 = vmatpush1.bf16.msra.mxu0 0
    %585 = vmatprep.subr.bf16.mxu0 0
    %586 = vmatpush1.bf16.msra.mxu0 0
    %587 = vmatprep.subr.bf16.mxu0 0
    %588 = vmatpush1.bf16.msra.mxu0 0
    %589 = vmatprep.subr.bf16.mxu0 0
    %590 = vmatpush1.bf16.msra.mxu0 0
    %591 = vmatprep.subr.bf16.mxu0 0
    %592 = vmatpush1.bf16.msra.mxu0 0
    %593 = vmatprep.subr.bf16.mxu0 0
    %594 = vmatpush1.bf16.msra.mxu0 0
    %595 = vmatprep.subr.bf16.mxu0 0
    %596 = vmatpush1.bf16.msra.mxu0 0
    %597 = vmatprep.subr.bf16.mxu0 0
    %598 = vmatpush1.bf16.msra.mxu0 0
    %599 = vmatprep.subr.bf16.mxu0 0
    %600 = vmatpush1.bf16.msra.mxu0 0
    %601 = vmatprep.subr.bf16.mxu0 0
    %602 = vmatpush1.bf16.msra.mxu0 0
    %603 = vmatprep.subr.bf16.mxu0 0
    %604 = vmatpush1.bf16.msra.mxu0 0
    %605 = vmatprep.subr.bf16.mxu0 0
    %606 = vmatpush1.bf16.msra.mxu0 0
    %607 = vmatprep.mubr.bf16.mxu0 0
    %608 = vmatmul.mubr.bf16.gmra.mrb[0].mxu0 %v570
    %v609 = vpop.f32.mrb[0].mxu0
    %v610 = vadd.f32 0.0, %v609
    %v611 = vpop.f32.mrb[0].mxu0
    %v612 = vpop.f32.mrb[0].mxu0
    %v613 = vpop.f32.mrb[0].mxu0
    %614 = vdwg.mxu0
    %615 = vrot.lane.b32.xlu0 %v173, 112
    %v616 = vpop.permute.xlu0 %615
    %617 = vrot.lane.b32.xlu0 %v173, 80
    %v618 = vpop.permute.xlu0 %617
    %v620 = vsel %vm178, %v616, 0
    %v623 = vsel %vm178, %v618, 0
    %625 = vmatprep.subr.bf16.mxu0 0
    %626 = vmatpush1.bf16.xpose.msra.mxu0 %v623
    %627 = vmatprep.subr.bf16.mxu0 0
    %628 = vmatpush1.bf16.xpose.msra.mxu0 0
    %629 = vmatprep.subr.bf16.mxu0 0
    %630 = vmatpush1.bf16.xpose.msra.mxu0 0
    %631 = vmatprep.subr.bf16.mxu0 0
    %632 = vmatpush1.bf16.xpose.msra.mxu0 0
    %633 = vmatprep.subr.bf16.mxu0 0
    %634 = vmatpush1.bf16.xpose.msra.mxu0 0
    %635 = vmatprep.subr.bf16.mxu0 0
    %636 = vmatpush1.bf16.xpose.msra.mxu0 0
    %637 = vmatprep.subr.bf16.mxu0 0
    %638 = vmatpush1.bf16.xpose.msra.mxu0 0
    %639 = vmatprep.subr.bf16.mxu0 0
    %640 = vmatpush1.bf16.xpose.msra.mxu0 0
    %641 = vmatprep.subr.bf16.mxu0 0
    %642 = vmatpush1.bf16.xpose.msra.mxu0 0
    %643 = vmatprep.subr.bf16.mxu0 0
    %644 = vmatpush1.bf16.xpose.msra.mxu0 0
    %645 = vmatprep.subr.bf16.mxu0 0
    %646 = vmatpush1.bf16.xpose.msra.mxu0 0
    %647 = vmatprep.subr.bf16.mxu0 0
    %648 = vmatpush1.bf16.xpose.msra.mxu0 0
    %649 = vmatprep.subr.bf16.mxu0 0
    %650 = vmatpush1.bf16.xpose.msra.mxu0 0
    %651 = vmatprep.subr.bf16.mxu0 0
    %652 = vmatpush1.bf16.xpose.msra.mxu0 0
    %653 = vmatprep.subr.bf16.mxu0 0
    %654 = vmatpush1.bf16.xpose.msra.mxu0 0
    %655 = vmatprep.subr.bf16.mxu0 0
    %656 = vmatpush1.bf16.xpose.msra.mxu0 0
    %657 = vmatprep.mubr.bf16.mxu0 0
    %658 = vmatmul.mubr.bf16.gmra.mrb[0].mxu0 %v620
    %v659 = vpop.f32.mrb[0].mxu0
    %v660 = vadd.f32 %v171, %v659
    %v661 = vpop.f32.mrb[0].mxu0
    %v662 = vpop.f32.mrb[0].mxu0
    %v663 = vpop.f32.mrb[0].mxu0
    %664 = vdwg.mxu0
    %665 = vrot.lane.b32.xlu0 %v174, 112
    %v666 = vpop.permute.xlu0 %665
    %667 = vrot.lane.b32.xlu0 %v174, 80
    %v668 = vpop.permute.xlu0 %667
    %v670 = vsel %vm178, %v666, 0
    %v673 = vsel %vm178, %v668, 0
    %675 = vmatprep.subr.bf16.mxu0 0
    %676 = vmatpush1.bf16.xpose.msra.mxu0 %v673
    %677 = vmatprep.subr.bf16.mxu0 0
    %678 = vmatpush1.bf16.xpose.msra.mxu0 0
    %679 = vmatprep.subr.bf16.mxu0 0
    %680 = vmatpush1.bf16.xpose.msra.mxu0 0
    %681 = vmatprep.subr.bf16.mxu0 0
    %682 = vmatpush1.bf16.xpose.msra.mxu0 0
    %683 = vmatprep.subr.bf16.mxu0 0
    %684 = vmatpush1.bf16.xpose.msra.mxu0 0
    %685 = vmatprep.subr.bf16.mxu0 0
    %686 = vmatpush1.bf16.xpose.msra.mxu0 0
    %687 = vmatprep.subr.bf16.mxu0 0
    %688 = vmatpush1.bf16.xpose.msra.mxu0 0
    %689 = vmatprep.subr.bf16.mxu0 0
    %690 = vmatpush1.bf16.xpose.msra.mxu0 0
    %691 = vmatprep.subr.bf16.mxu0 0
    %692 = vmatpush1.bf16.xpose.msra.mxu0 0
    %693 = vmatprep.subr.bf16.mxu0 0
    %694 = vmatpush1.bf16.xpose.msra.mxu0 0
    %695 = vmatprep.subr.bf16.mxu0 0
    %696 = vmatpush1.bf16.xpose.msra.mxu0 0
    %697 = vmatprep.subr.bf16.mxu0 0
    %698 = vmatpush1.bf16.xpose.msra.mxu0 0
    %699 = vmatprep.subr.bf16.mxu0 0
    %700 = vmatpush1.bf16.xpose.msra.mxu0 0
    %701 = vmatprep.subr.bf16.mxu0 0
    %702 = vmatpush1.bf16.xpose.msra.mxu0 0
    %703 = vmatprep.subr.bf16.mxu0 0
    %704 = vmatpush1.bf16.xpose.msra.mxu0 0
    %705 = vmatprep.subr.bf16.mxu0 0
    %706 = vmatpush1.bf16.xpose.msra.mxu0 0
    %707 = vmatprep.mubr.bf16.mxu0 0
    %708 = vmatmul.mubr.bf16.gmra.mrb[0].mxu0 %v670
    %v709 = vpop.f32.mrb[0].mxu0
    %v710 = vadd.f32 %v172, %v709
    %v711 = vpop.f32.mrb[0].mxu0
    %v712 = vpop.f32.mrb[0].mxu0
    %v713 = vpop.f32.mrb[0].mxu0
    %714 = vdwg.mxu0
    %v715 = vsel %vm178, %v660, -inf
    %716 = vmax.xlane.f32.xlu0 %v715
    %v717 = vpop.xlane.xlu0 %716
    %v718 = vsel %vm178, %v710, -inf
    %719 = vmax.xlane.f32.xlu0 %v718
    %v720 = vpop.xlane.xlu0 %719
    %v721 = vsub.f32 %v660, %v717
    %v722 = vsub.f32 %v710, %v720
    %v723 = vmul.f32 %v721, 1.442695
    %v724 = vpow.pop %v723
    %v725 = vmul.f32 %v722, 1.442695
    %v726 = vpow.pop %v725
    %v727 = vsel %vm178, %v724, 0.0
    %728 = vadd.xlane.f32.xlu0 %v727
    %v729 = vpop.xlane.xlu0 %728
    %v730 = vsel %vm178, %v726, 0.0
    %731 = vadd.xlane.f32.xlu0 %v730
    %v732 = vpop.xlane.xlu0 %731
    %v733 = vrcp.pop %v729
    %v734 = vrcp.pop %v732
    %v735 = vmul.f32 %v724, %v733
    %v736 = vmul.f32 %v726, %v734
    %v737 = vpack.c.bf16 %v735, %v735
    %v738 = vpack.c.bf16 %v736, %v736
    %739 = vrot.lane.b32.xlu0 %v173, 48
    %v740 = vpop.permute.xlu0 %739
    %v742 = vsel %vm178, %v737, 0
    %v745 = vsel %vm303, %v740, 0
    %747 = vmatprep.subr.bf16.mxu0 0
    %748 = vmatpush1.bf16.msra.mxu0 %v745
    %749 = vmatprep.subr.bf16.mxu0 0
    %750 = vmatpush1.bf16.msra.mxu0 0
    %751 = vmatprep.subr.bf16.mxu0 0
    %752 = vmatpush1.bf16.msra.mxu0 0
    %753 = vmatprep.subr.bf16.mxu0 0
    %754 = vmatpush1.bf16.msra.mxu0 0
    %755 = vmatprep.subr.bf16.mxu0 0
    %756 = vmatpush1.bf16.msra.mxu0 0
    %757 = vmatprep.subr.bf16.mxu0 0
    %758 = vmatpush1.bf16.msra.mxu0 0
    %759 = vmatprep.subr.bf16.mxu0 0
    %760 = vmatpush1.bf16.msra.mxu0 0
    %761 = vmatprep.subr.bf16.mxu0 0
    %762 = vmatpush1.bf16.msra.mxu0 0
    %763 = vmatprep.subr.bf16.mxu0 0
    %764 = vmatpush1.bf16.msra.mxu0 0
    %765 = vmatprep.subr.bf16.mxu0 0
    %766 = vmatpush1.bf16.msra.mxu0 0
    %767 = vmatprep.subr.bf16.mxu0 0
    %768 = vmatpush1.bf16.msra.mxu0 0
    %769 = vmatprep.subr.bf16.mxu0 0
    %770 = vmatpush1.bf16.msra.mxu0 0
    %771 = vmatprep.subr.bf16.mxu0 0
    %772 = vmatpush1.bf16.msra.mxu0 0
    %773 = vmatprep.subr.bf16.mxu0 0
    %774 = vmatpush1.bf16.msra.mxu0 0
    %775 = vmatprep.subr.bf16.mxu0 0
    %776 = vmatpush1.bf16.msra.mxu0 0
    %777 = vmatprep.subr.bf16.mxu0 0
    %778 = vmatpush1.bf16.msra.mxu0 0
    %779 = vmatprep.mubr.bf16.mxu0 0
    %780 = vmatmul.mubr.bf16.gmra.mrb[0].mxu0 %v742
    %v781 = vpop.f32.mrb[0].mxu0
    %v782 = vadd.f32 0.0, %v781
    %v783 = vpop.f32.mrb[0].mxu0
    %v784 = vpop.f32.mrb[0].mxu0
    %v785 = vpop.f32.mrb[0].mxu0
    %786 = vdwg.mxu0
    %787 = vrot.lane.b32.xlu0 %v174, 48
    %v788 = vpop.permute.xlu0 %787
    %v790 = vsel %vm178, %v738, 0
    %v793 = vsel %vm303, %v788, 0
    %795 = vmatprep.subr.bf16.mxu0 0
    %796 = vmatpush1.bf16.msra.mxu0 %v793
    %797 = vmatprep.subr.bf16.mxu0 0
    %798 = vmatpush1.bf16.msra.mxu0 0
    %799 = vmatprep.subr.bf16.mxu0 0
    %800 = vmatpush1.bf16.msra.mxu0 0
    %801 = vmatprep.subr.bf16.mxu0 0
    %802 = vmatpush1.bf16.msra.mxu0 0
    %803 = vmatprep.subr.bf16.mxu0 0
    %804 = vmatpush1.bf16.msra.mxu0 0
    %805 = vmatprep.subr.bf16.mxu0 0
    %806 = vmatpush1.bf16.msra.mxu0 0
    %807 = vmatprep.subr.bf16.mxu0 0
    %808 = vmatpush1.bf16.msra.mxu0 0
    %809 = vmatprep.subr.bf16.mxu0 0
    %810 = vmatpush1.bf16.msra.mxu0 0
    %811 = vmatprep.subr.bf16.mxu0 0
    %812 = vmatpush1.bf16.msra.mxu0 0
    %813 = vmatprep.subr.bf16.mxu0 0
    %814 = vmatpush1.bf16.msra.mxu0 0
    %815 = vmatprep.subr.bf16.mxu0 0
    %816 = vmatpush1.bf16.msra.mxu0 0
    %817 = vmatprep.subr.bf16.mxu0 0
    %818 = vmatpush1.bf16.msra.mxu0 0
    %819 = vmatprep.subr.bf16.mxu0 0
    %820 = vmatpush1.bf16.msra.mxu0 0
    %821 = vmatprep.subr.bf16.mxu0 0
    %822 = vmatpush1.bf16.msra.mxu0 0
    %823 = vmatprep.subr.bf16.mxu0 0
    %824 = vmatpush1.bf16.msra.mxu0 0
    %825 = vmatprep.subr.bf16.mxu0 0
    %826 = vmatpush1.bf16.msra.mxu0 0
    %827 = vmatprep.mubr.bf16.mxu0 0
    %828 = vmatmul.mubr.bf16.gmra.mrb[0].mxu0 %v790
    %v829 = vpop.f32.mrb[0].mxu0
    %v830 = vadd.f32 0.0, %v829
    %v831 = vpop.f32.mrb[0].mxu0
    %v832 = vpop.f32.mrb[0].mxu0
    %v833 = vpop.f32.mrb[0].mxu0
    %834 = vdwg.mxu0
    %835 = vrot.lane.b32.xlu0 %v173, 104
    %v836 = vpop.permute.xlu0 %835
    %837 = vrot.lane.b32.xlu0 %v173, 72
    %v838 = vpop.permute.xlu0 %837
    %v840 = vsel %vm178, %v836, 0
    %v843 = vsel %vm178, %v838, 0
    %845 = vmatprep.subr.bf16.mxu0 0
    %846 = vmatpush1.bf16.xpose.msra.mxu0 %v843
    %847 = vmatprep.subr.bf16.mxu0 0
    %848 = vmatpush1.bf16.xpose.msra.mxu0 0
    %849 = vmatprep.subr.bf16.mxu0 0
    %850 = vmatpush1.bf16.xpose.msra.mxu0 0
    %851 = vmatprep.subr.bf16.mxu0 0
    %852 = vmatpush1.bf16.xpose.msra.mxu0 0
    %853 = vmatprep.subr.bf16.mxu0 0
    %854 = vmatpush1.bf16.xpose.msra.mxu0 0
    %855 = vmatprep.subr.bf16.mxu0 0
    %856 = vmatpush1.bf16.xpose.msra.mxu0 0
    %857 = vmatprep.subr.bf16.mxu0 0
    %858 = vmatpush1.bf16.xpose.msra.mxu0 0
    %859 = vmatprep.subr.bf16.mxu0 0
    %860 = vmatpush1.bf16.xpose.msra.mxu0 0
    %861 = vmatprep.subr.bf16.mxu0 0
    %862 = vmatpush1.bf16.xpose.msra.mxu0 0
    %863 = vmatprep.subr.bf16.mxu0 0
    %864 = vmatpush1.bf16.xpose.msra.mxu0 0
    %865 = vmatprep.subr.bf16.mxu0 0
    %866 = vmatpush1.bf16.xpose.msra.mxu0 0
    %867 = vmatprep.subr.bf16.mxu0 0
    %868 = vmatpush1.bf16.xpose.msra.mxu0 0
    %869 = vmatprep.subr.bf16.mxu0 0
    %870 = vmatpush1.bf16.xpose.msra.mxu0 0
    %871 = vmatprep.subr.bf16.mxu0 0
    %872 = vmatpush1.bf16.xpose.msra.mxu0 0
    %873 = vmatprep.subr.bf16.mxu0 0
    %874 = vmatpush1.bf16.xpose.msra.mxu0 0
    %875 = vmatprep.subr.bf16.mxu0 0
    %876 = vmatpush1.bf16.xpose.msra.mxu0 0
    %877 = vmatprep.mubr.bf16.mxu0 0
    %878 = vmatmul.mubr.bf16.gmra.mrb[0].mxu0 %v840
    %v879 = vpop.f32.mrb[0].mxu0
    %v880 = vadd.f32 %v171, %v879
    %v881 = vpop.f32.mrb[0].mxu0
    %v882 = vpop.f32.mrb[0].mxu0
    %v883 = vpop.f32.mrb[0].mxu0
    %884 = vdwg.mxu0
    %885 = vrot.lane.b32.xlu0 %v174, 104
    %v886 = vpop.permute.xlu0 %885
    %887 = vrot.lane.b32.xlu0 %v174, 72
    %v888 = vpop.permute.xlu0 %887
    %v890 = vsel %vm178, %v886, 0
    %v893 = vsel %vm178, %v888, 0
    %895 = vmatprep.subr.bf16.mxu0 0
    %896 = vmatpush1.bf16.xpose.msra.mxu0 %v893
    %897 = vmatprep.subr.bf16.mxu0 0
    %898 = vmatpush1.bf16.xpose.msra.mxu0 0
    %899 = vmatprep.subr.bf16.mxu0 0
    %900 = vmatpush1.bf16.xpose.msra.mxu0 0
    %901 = vmatprep.subr.bf16.mxu0 0
    %902 = vmatpush1.bf16.xpose.msra.mxu0 0
    %903 = vmatprep.subr.bf16.mxu0 0
    %904 = vmatpush1.bf16.xpose.msra.mxu0 0
    %905 = vmatprep.subr.bf16.mxu0 0
    %906 = vmatpush1.bf16.xpose.msra.mxu0 0
    %907 = vmatprep.subr.bf16.mxu0 0
    %908 = vmatpush1.bf16.xpose.msra.mxu0 0
    %909 = vmatprep.subr.bf16.mxu0 0
    %910 = vmatpush1.bf16.xpose.msra.mxu0 0
    %911 = vmatprep.subr.bf16.mxu0 0
    %912 = vmatpush1.bf16.xpose.msra.mxu0 0
    %913 = vmatprep.subr.bf16.mxu0 0
    %914 = vmatpush1.bf16.xpose.msra.mxu0 0
    %915 = vmatprep.subr.bf16.mxu0 0
    %916 = vmatpush1.bf16.xpose.msra.mxu0 0
    %917 = vmatprep.subr.bf16.mxu0 0
    %918 = vmatpush1.bf16.xpose.msra.mxu0 0
    %919 = vmatprep.subr.bf16.mxu0 0
    %920 = vmatpush1.bf16.xpose.msra.mxu0 0
    %921 = vmatprep.subr.bf16.mxu0 0
    %922 = vmatpush1.bf16.xpose.msra.mxu0 0
    %923 = vmatprep.subr.bf16.mxu0 0
    %924 = vmatpush1.bf16.xpose.msra.mxu0 0
    %925 = vmatprep.subr.bf16.mxu0 0
    %926 = vmatpush1.bf16.xpose.msra.mxu0 0
    %927 = vmatprep.mubr.bf16.mxu0 0
    %928 = vmatmul.mubr.bf16.gmra.mrb[0].mxu0 %v890
    %v929 = vpop.f32.mrb[0].mxu0
    %v930 = vadd.f32 %v172, %v929
    %v931 = vpop.f32.mrb[0].mxu0
    %v932 = vpop.f32.mrb[0].mxu0
    %v933 = vpop.f32.mrb[0].mxu0
    %934 = vdwg.mxu0
    %v935 = vsel %vm178, %v880, -inf
    %936 = vmax.xlane.f32.xlu0 %v935
    %v937 = vpop.xlane.xlu0 %936
    %v938 = vsel %vm178, %v930, -inf
    %939 = vmax.xlane.f32.xlu0 %v938
    %v940 = vpop.xlane.xlu0 %939
    %v941 = vsub.f32 %v880, %v937
    %v942 = vsub.f32 %v930, %v940
    %v943 = vmul.f32 %v941, 1.442695
    %v944 = vpow.pop %v943
    %v945 = vmul.f32 %v942, 1.442695
    %v946 = vpow.pop %v945
    %v947 = vsel %vm178, %v944, 0.0
    %948 = vadd.xlane.f32.xlu0 %v947
    %v949 = vpop.xlane.xlu0 %948
    %v950 = vsel %vm178, %v946, 0.0
    %951 = vadd.xlane.f32.xlu0 %v950
    %v952 = vpop.xlane.xlu0 %951
    %v953 = vrcp.pop %v949
    %v954 = vrcp.pop %v952
    %v955 = vmul.f32 %v944, %v953
    %v956 = vmul.f32 %v946, %v954
    %v957 = vpack.c.bf16 %v955, %v955
    %v958 = vpack.c.bf16 %v956, %v956
    %959 = vrot.lane.b32.xlu0 %v173, 40
    %v960 = vpop.permute.xlu0 %959
    %v962 = vsel %vm178, %v957, 0
    %v965 = vsel %vm303, %v960, 0
    %967 = vmatprep.subr.bf16.mxu0 0
    %968 = vmatpush1.bf16.msra.mxu0 %v965
    %969 = vmatprep.subr.bf16.mxu0 0
    %970 = vmatpush1.bf16.msra.mxu0 0
    %971 = vmatprep.subr.bf16.mxu0 0
    %972 = vmatpush1.bf16.msra.mxu0 0
    %973 = vmatprep.subr.bf16.mxu0 0
    %974 = vmatpush1.bf16.msra.mxu0 0
    %975 = vmatprep.subr.bf16.mxu0 0
    %976 = vmatpush1.bf16.msra.mxu0 0
    %977 = vmatprep.subr.bf16.mxu0 0
    %978 = vmatpush1.bf16.msra.mxu0 0
    %979 = vmatprep.subr.bf16.mxu0 0
    %980 = vmatpush1.bf16.msra.mxu0 0
    %981 = vmatprep.subr.bf16.mxu0 0
    %982 = vmatpush1.bf16.msra.mxu0 0
    %983 = vmatprep.subr.bf16.mxu0 0
    %984 = vmatpush1.bf16.msra.mxu0 0
    %985 = vmatprep.subr.bf16.mxu0 0
    %986 = vmatpush1.bf16.msra.mxu0 0
    %987 = vmatprep.subr.bf16.mxu0 0
    %988 = vmatpush1.bf16.msra.mxu0 0
    %989 = vmatprep.subr.bf16.mxu0 0
    %990 = vmatpush1.bf16.msra.mxu0 0
    %991 = vmatprep.subr.bf16.mxu0 0
    %992 = vmatpush1.bf16.msra.mxu0 0
    %993 = vmatprep.subr.bf16.mxu0 0
    %994 = vmatpush1.bf16.msra.mxu0 0
    %995 = vmatprep.subr.bf16.mxu0 0
    %996 = vmatpush1.bf16.msra.mxu0 0
    %997 = vmatprep.subr.bf16.mxu0 0
    %998 = vmatpush1.bf16.msra.mxu0 0
    %999 = vmatprep.mubr.bf16.mxu0 0
    %1000 = vmatmul.mubr.bf16.gmra.mrb[0].mxu0 %v962
    %v1001 = vpop.f32.mrb[0].mxu0
    %v1002 = vadd.f32 0.0, %v1001
    %v1003 = vpop.f32.mrb[0].mxu0
    %v1004 = vpop.f32.mrb[0].mxu0
    %v1005 = vpop.f32.mrb[0].mxu0
    %1006 = vdwg.mxu0
    %1007 = vrot.lane.b32.xlu0 %v174, 40
    %v1008 = vpop.permute.xlu0 %1007
    %v1010 = vsel %vm178, %v958, 0
    %v1013 = vsel %vm303, %v1008, 0
    %1015 = vmatprep.subr.bf16.mxu0 0
    %1016 = vmatpush1.bf16.msra.mxu0 %v1013
    %1017 = vmatprep.subr.bf16.mxu0 0
    %1018 = vmatpush1.bf16.msra.mxu0 0
    %1019 = vmatprep.subr.bf16.mxu0 0
    %1020 = vmatpush1.bf16.msra.mxu0 0
    %1021 = vmatprep.subr.bf16.mxu0 0
    %1022 = vmatpush1.bf16.msra.mxu0 0
    %1023 = vmatprep.subr.bf16.mxu0 0
    %1024 = vmatpush1.bf16.msra.mxu0 0
    %1025 = vmatprep.subr.bf16.mxu0 0
    %1026 = vmatpush1.bf16.msra.mxu0 0
    %1027 = vmatprep.subr.bf16.mxu0 0
    %1028 = vmatpush1.bf16.msra.mxu0 0
    %1029 = vmatprep.subr.bf16.mxu0 0
    %1030 = vmatpush1.bf16.msra.mxu0 0
    %1031 = vmatprep.subr.bf16.mxu0 0
    %1032 = vmatpush1.bf16.msra.mxu0 0
    %1033 = vmatprep.subr.bf16.mxu0 0
    %1034 = vmatpush1.bf16.msra.mxu0 0
    %1035 = vmatprep.subr.bf16.mxu0 0
    %1036 = vmatpush1.bf16.msra.mxu0 0
    %1037 = vmatprep.subr.bf16.mxu0 0
    %1038 = vmatpush1.bf16.msra.mxu0 0
    %1039 = vmatprep.subr.bf16.mxu0 0
    %1040 = vmatpush1.bf16.msra.mxu0 0
    %1041 = vmatprep.subr.bf16.mxu0 0
    %1042 = vmatpush1.bf16.msra.mxu0 0
    %1043 = vmatprep.subr.bf16.mxu0 0
    %1044 = vmatpush1.bf16.msra.mxu0 0
    %1045 = vmatprep.subr.bf16.mxu0 0
    %1046 = vmatpush1.bf16.msra.mxu0 0
    %1047 = vmatprep.mubr.bf16.mxu0 0
    %1048 = vmatmul.mubr.bf16.gmra.mrb[0].mxu0 %v1010
    %v1049 = vpop.f32.mrb[0].mxu0
    %v1050 = vadd.f32 0.0, %v1049
    %v1051 = vpop.f32.mrb[0].mxu0
    %v1052 = vpop.f32.mrb[0].mxu0
    %v1053 = vpop.f32.mrb[0].mxu0
    %1054 = vdwg.mxu0
    %1057 = vrot.lane.b32.xlu0 %v562, 8
    %v1058 = vpop.permute.xlu0 %1057
    %1059 = vrot.lane.b32.xlu0 %v610, 8
    %v1060 = vpop.permute.xlu0 %1059
    %1065 = vrot.lane.b32.xlu0 %v782, 16
    %v1066 = vpop.permute.xlu0 %1065
    %1067 = vrot.lane.b32.xlu0 %v830, 16
    %v1068 = vpop.permute.xlu0 %1067
    %1073 = vrot.lane.b32.xlu0 %v1002, 24
    %v1074 = vpop.permute.xlu0 %1073
    %1075 = vrot.lane.b32.xlu0 %v1050, 24
    %v1076 = vpop.permute.xlu0 %1075
    %v1079 = vsel %vm178, %v342, %v1058
    %v1080 = vsel %vm178, %v390, %v1060
    %vm1081 = vcmask 130048
    %v1082 = vsel %vm1081, %v1079, %v1066
    %v1083 = vsel %vm1081, %v1080, %v1068
    %vm1084 = vcmask 195584
    %v1085 = vsel %vm1084, %v1082, %v1074
    %v1086 = vsel %vm1084, %v1083, %v1076
    %v1087 = vpack.c.bf16 %v1086, %v1085
    %v1088 = vld [vmem:[%s3 + $0x4] sm:$0xf]
    %v1089 = vld [vmem:[%s3 + $0x10] sm:$0xf]
    %v1090 = vld [vmem:[%s3 + $0x1c] sm:$0xf]
    %v1091 = vld [vmem:[%s3 + $0x28] sm:$0xf]
    %v1092 = vlaneseq
    %v1093 = vshrl.u32 %v1092, 7
    %v1094 = vsub.s32 0, %v1093
    %v1095 = vrot.slane %v43, %v1094
    %v1100 = vunpack.c.l.b16 %v1088
    %v1101 = vunpack.c.l.b16 %v1089
    %v1102 = vunpack.c.l.b16 %v1090
    %v1103 = vunpack.c.l.b16 %v1091
    %v1104 = vpack.c.b16 %v1101, %v1100
    %v1105 = vpack.c.b16 %v1103, %v1102
    %v1109 = vsel %vm50, %v1087, 0
    %1111 = vmatprep.subr.bf16.mxu0 0
    %1112 = vmatpush1.bf16.msra.mxu0 %v1104
    %1113 = vmatprep.subr.bf16.mxu0 0
    %1114 = vmatpush1.bf16.msra.mxu0 %v1105
    %1115 = vmatprep.subr.bf16.mxu0 0
    %1116 = vmatpush1.bf16.msra.mxu0 0
    %1117 = vmatprep.subr.bf16.mxu0 0
    %1118 = vmatpush1.bf16.msra.mxu0 0
    %1119 = vmatprep.subr.bf16.mxu0 0
    %1120 = vmatpush1.bf16.msra.mxu0 0
    %1121 = vmatprep.subr.bf16.mxu0 0
    %1122 = vmatpush1.bf16.msra.mxu0 0
    %1123 = vmatprep.subr.bf16.mxu0 0
    %1124 = vmatpush1.bf16.msra.mxu0 0
    %1125 = vmatprep.subr.bf16.mxu0 0
    %1126 = vmatpush1.bf16.msra.mxu0 0
    %1127 = vmatprep.subr.bf16.mxu0 0
    %1128 = vmatpush1.bf16.msra.mxu0 0
    %1129 = vmatprep.subr.bf16.mxu0 0
    %1130 = vmatpush1.bf16.msra.mxu0 0
    %1131 = vmatprep.subr.bf16.mxu0 0
    %1132 = vmatpush1.bf16.msra.mxu0 0
    %1133 = vmatprep.subr.bf16.mxu0 0
    %1134 = vmatpush1.bf16.msra.mxu0 0
    %1135 = vmatprep.subr.bf16.mxu0 0
    %1136 = vmatpush1.bf16.msra.mxu0 0
    %1137 = vmatprep.subr.bf16.mxu0 0
    %1138 = vmatpush1.bf16.msra.mxu0 0
    %1139 = vmatprep.subr.bf16.mxu0 0
    %1140 = vmatpush1.bf16.msra.mxu0 0
    %1141 = vmatprep.subr.bf16.mxu0 0
    %1142 = vmatpush1.bf16.msra.mxu0 0
    %1143 = vmatprep.mubr.bf16.mxu0 0
    %1144 = vmatmul.mubr.bf16.gmra.mrb[0].mxu0 %v1109
    %v1145 = vpop.f32.mrb[0].mxu0
    %v1146 = vadd.f32 %v1095, %v1145
    %v1147 = vpop.f32.mrb[0].mxu0
    %v1148 = vpop.f32.mrb[0].mxu0
    %v1149 = vadd.f32 %v1095, %v1148
    %v1150 = vpop.f32.mrb[0].mxu0
    %1151 = vdwg.mxu0
    %v1152 = vadd.f32 %v48, %v1146
    %v1153 = vadd.f32 %v49, %v1149
    %v1154 = vsel %vm50, %v1152, 0.0
    %1155 = vadd.xlane.f32.xlu0 %v1154
    %v1156 = vpop.xlane.xlu0 %1155
    %v1157 = vsel %vm50, %v1153, 0.0
    %1158 = vadd.xlane.f32.xlu0 %v1157
    %v1159 = vpop.xlane.xlu0 %1158
    %v1160 = vmul.f32 %v1156, %v57
    %v1161 = vmul.f32 %v1159, %v57
    %v1162 = vsub.f32 %v1152, %v1160
    %v1163 = vsub.f32 %v1153, %v1161
    %v1164 = vmul.f32 %v1162, %v1162
    %v1165 = vmul.f32 %v1163, %v1163
    %v1166 = vsel %vm50, %v1164, 0.0
    %1167 = vadd.xlane.f32.xlu0 %v1166
    %v1168 = vpop.xlane.xlu0 %1167
    %v1169 = vsel %vm50, %v1165, 0.0
    %1170 = vadd.xlane.f32.xlu0 %v1169
    %v1171 = vpop.xlane.xlu0 %1170
    %v1172 = vmul.f32 %v1168, %v57
    %v1173 = vmul.f32 %v1171, %v57
    %v1174 = vadd.f32 %v1172, 1e-05
    %v1175 = vadd.f32 %v1173, 1e-05
    %v1176 = vrsqrt.pop %v1174
    %v1177 = vrsqrt.pop %v1175
    %v1178 = vmul.f32 %v1162, %v1176
    %v1179 = vmul.f32 %v1163, %v1177
    %v1180 = vlaneseq
    %v1181 = vshrl.u32 %v1180, 7
    %v1182 = vsub.s32 0, %v1181
    %v1183 = vrot.slane %v44, %v1182
    %v1184 = vmul.f32 %v1178, %v1183
    %v1185 = vmul.f32 %v1179, %v1183
    %v1186 = vlaneseq
    %v1187 = vshrl.u32 %v1186, 7
    %v1188 = vsub.s32 0, %v1187
    %v1189 = vrot.slane %v45, %v1188
    %v1190 = vadd.f32 %v1184, %v1189
    %v1191 = vadd.f32 %v1185, %v1189
    %v1192 = vpack.c.bf16 %v1191, %v1190
    %v1193 = vld [vmem:[%s3 + $0x8] sm:$0xf]
    %v1194 = vld [vmem:[%s3 + $0x14] sm:$0xf]
    %v1195 = vld [vmem:[%s3 + $0x20] sm:$0xf]
    %v1196 = vld [vmem:[%s3 + $0x2c] sm:$0xf]
    %v1197 = vlaneseq
    %v1198 = vshrl.u32 %v1197, 7
    %v1199 = vsub.s32 0, %v1198
    %v1200 = vrot.slane %v46, %v1199
    %v1205 = vunpack.c.l.b16 %v1193
    %v1206 = vunpack.c.l.b16 %v1194
    %v1207 = vunpack.c.l.b16 %v1195
    %v1208 = vunpack.c.l.b16 %v1196
    %v1209 = vpack.c.b16 %v1206, %v1205
    %v1210 = vpack.c.b16 %v1208, %v1207
    %v1214 = vsel %vm50, %v1192, 0
    %1216 = vmatprep.subr.bf16.mxu0 0
    %1217 = vmatpush1.bf16.msra.mxu0 %v1209
    %1218 = vmatprep.subr.bf16.mxu0 0
    %1219 = vmatpush1.bf16.msra.mxu0 %v1210
    %1220 = vmatprep.subr.bf16.mxu0 0
    %1221 = vmatpush1.bf16.msra.mxu0 0
    %1222 = vmatprep.subr.bf16.mxu0 0
    %1223 = vmatpush1.bf16.msra.mxu0 0
    %1224 = vmatprep.subr.bf16.mxu0 0
    %1225 = vmatpush1.bf16.msra.mxu0 0
    %1226 = vmatprep.subr.bf16.mxu0 0
    %1227 = vmatpush1.bf16.msra.mxu0 0
    %1228 = vmatprep.subr.bf16.mxu0 0
    %1229 = vmatpush1.bf16.msra.mxu0 0
    %1230 = vmatprep.subr.bf16.mxu0 0
    %1231 = vmatpush1.bf16.msra.mxu0 0
    %1232 = vmatprep.subr.bf16.mxu0 0
    %1233 = vmatpush1.bf16.msra.mxu0 0
    %1234 = vmatprep.subr.bf16.mxu0 0
    %1235 = vmatpush1.bf16.msra.mxu0 0
    %1236 = vmatprep.subr.bf16.mxu0 0
    %1237 = vmatpush1.bf16.msra.mxu0 0
    %1238 = vmatprep.subr.bf16.mxu0 0
    %1239 = vmatpush1.bf16.msra.mxu0 0
    %1240 = vmatprep.subr.bf16.mxu0 0
    %1241 = vmatpush1.bf16.msra.mxu0 0
    %1242 = vmatprep.subr.bf16.mxu0 0
    %1243 = vmatpush1.bf16.msra.mxu0 0
    %1244 = vmatprep.subr.bf16.mxu0 0
    %1245 = vmatpush1.bf16.msra.mxu0 0
    %1246 = vmatprep.subr.bf16.mxu0 0
    %1247 = vmatpush1.bf16.msra.mxu0 0
    %1248 = vmatprep.mubr.bf16.mxu0 0
    %1249 = vmatmul.mubr.bf16.gmra.mrb[0].mxu0 %v1214
    %v1250 = vpop.f32.mrb[0].mxu0
    %v1251 = vadd.f32 %v1200, %v1250
    %v1252 = vpop.f32.mrb[0].mxu0
    %v1253 = vpop.f32.mrb[0].mxu0
    %v1254 = vadd.f32 %v1200, %v1253
    %v1255 = vpop.f32.mrb[0].mxu0
    %1256 = vdwg.mxu0
    %v1257 = vmax.f32 %v1251, 0.0
    %v1258 = vmax.f32 %v1254, 0.0
    %v1259 = vpack.c.bf16 %v1258, %v1257
    %v1260 = vld [vmem:[%s4] sm:$0xf]
    %v1261 = vld [vmem:[%s4 + $0x4] sm:$0xf]
    %v1262 = vld [vmem:[%s4 + $0x8] sm:$0xf]
    %v1263 = vld [vmem:[%s4 + $0xc] sm:$0xf]
    %v1264 = vld [vmem:[%s4 + $0x10] sm:$0xf]
    %v1265 = vld [vmem:[%s4 + $0x14] sm:$0xf]
    %v1266 = vld [vmem:[%s4 + $0x18] sm:$0xf]
    %v1267 = vld [vmem:[%s4 + $0x1c] sm:$0xf]
    %v1268 = vlaneseq
    %v1269 = vshrl.u32 %v1268, 7
    %v1270 = vsub.s32 0, %v1269
    %v1271 = vrot.slane %v47, %v1270
    %v1280 = vunpack.c.l.b16 %v1260
    %v1281 = vunpack.c.l.b16 %v1261
    %v1282 = vunpack.c.l.b16 %v1262
    %v1283 = vunpack.c.l.b16 %v1263
    %v1284 = vunpack.c.l.b16 %v1264
    %v1285 = vunpack.c.l.b16 %v1265
    %v1286 = vunpack.c.l.b16 %v1266
    %v1287 = vunpack.c.l.b16 %v1267
    %v1288 = vpack.c.b16 %v1281, %v1280
    %v1289 = vpack.c.b16 %v1283, %v1282
    %v1290 = vpack.c.b16 %v1285, %v1284
    %v1291 = vpack.c.b16 %v1287, %v1286
    %vm1296 = vcmask 523264
    %v1298 = vsel %vm1296, %v1259, 0
    %1300 = vmatprep.subr.bf16.mxu0 0
    %1301 = vmatpush1.bf16.msra.mxu0 %v1288
    %1302 = vmatprep.subr.bf16.mxu0 0
    %1303 = vmatpush1.bf16.msra.mxu0 %v1289
    %1304 = vmatprep.subr.bf16.mxu0 0
    %1305 = vmatpush1.bf16.msra.mxu0 %v1290
    %1306 = vmatprep.subr.bf16.mxu0 0
    %1307 = vmatpush1.bf16.msra.mxu0 %v1291
    %1308 = vmatprep.subr.bf16.mxu0 0
    %1309 = vmatpush1.bf16.msra.mxu0 0
    %1310 = vmatprep.subr.bf16.mxu0 0
    %1311 = vmatpush1.bf16.msra.mxu0 0
    %1312 = vmatprep.subr.bf16.mxu0 0
    %1313 = vmatpush1.bf16.msra.mxu0 0
    %1314 = vmatprep.subr.bf16.mxu0 0
    %1315 = vmatpush1.bf16.msra.mxu0 0
    %1316 = vmatprep.subr.bf16.mxu0 0
    %1317 = vmatpush1.bf16.msra.mxu0 0
    %1318 = vmatprep.subr.bf16.mxu0 0
    %1319 = vmatpush1.bf16.msra.mxu0 0
    %1320 = vmatprep.subr.bf16.mxu0 0
    %1321 = vmatpush1.bf16.msra.mxu0 0
    %1322 = vmatprep.subr.bf16.mxu0 0
    %1323 = vmatpush1.bf16.msra.mxu0 0
    %1324 = vmatprep.subr.bf16.mxu0 0
    %1325 = vmatpush1.bf16.msra.mxu0 0
    %1326 = vmatprep.subr.bf16.mxu0 0
    %1327 = vmatpush1.bf16.msra.mxu0 0
    %1328 = vmatprep.subr.bf16.mxu0 0
    %1329 = vmatpush1.bf16.msra.mxu0 0
    %1330 = vmatprep.subr.bf16.mxu0 0
    %1331 = vmatpush1.bf16.msra.mxu0 0
    %1332 = vmatprep.mubr.bf16.mxu0 0
    %1333 = vmatmul.mubr.bf16.gmra.mrb[0].mxu0 %v1298
    %v1334 = vpop.f32.mrb[0].mxu0
    %v1335 = vadd.f32 %v1271, %v1334
    %v1336 = vpop.f32.mrb[0].mxu0
    %v1337 = vpop.f32.mrb[0].mxu0
    %v1338 = vadd.f32 %v1271, %v1337
    %v1339 = vpop.f32.mrb[0].mxu0
    %1340 = vdwg.mxu0
    %v1341 = vadd.f32 %v1152, %v1335
    %v1342 = vadd.f32 %v1153, %v1338
    %1343 = vst.msk [vmem:[#allocation7] sm:$0xff] %vm50, %v1341
    %1344 = vst.msk [vmem:[#allocation7 + $0x8] sm:$0xff] %vm50, %v1342
    // Predicated region
    $region22: #{tpu_custom_call.1} parent=1 // pred_check
      _
    $region23: #{tpu_custom_call.1} parent=1 // pred_check_branch
      %1346 = sbr.rel (0) target = $region25
    $region24: #{tpu_custom_call.1} parent=1 // pred_region
      %s1348 = ssub.s32 256, 256
      %1349 = vsyncadd [#allocation6], %s1348
      %s1350 = sshll.u32 [#allocation7], 4
      %s1351 = int_to_ptr.vmem [resolvable:$true] %s1350
      %1356 = dma.vmem_to_hbm [thread:$0]  %s1351, 256, %s5, [#allocation6], 128, 128, 8
    $region25: #{tpu_custom_call.1} parent=1 // pred_fallthru
      _
    // Predicated region
    $region26: #{tpu_custom_call.1} parent=1 // pred_check
      _
    $region27: #{tpu_custom_call.1} parent=1 // pred_check_branch
      %1358 = sbr.rel (0) target = $region29
    $region28: #{tpu_custom_call.1} parent=1 // pred_region
      %1359 = dma.done [#allocation6], 256
    $region29: #{tpu_custom_call.1} parent=1 // pred_fallthru
      _
    %1360 = vsyncpa [#allocation5], 1
    %1361 = vsyncpa [#allocation6], 1

</llo_original>
